<compile_context>
chip_gen: v7x
topology: tpu7x:2x2x1
jax: 0.10.0
libtpu: 0.0.40
codegen_flags: <defaults>
</compile_context>

<pallas_src>
import math
import functools

import jax
import jax.numpy as jnp
from jax.experimental import pallas as pl
from jax.experimental.pallas import tpu as pltpu


def _round_up(x, m):
    return -(-x // m) * m


def _phys(shape, itemsize):
    """Physical VMEM bytes of an array under (8, 128) tiling of the last 2 dims."""
    if len(shape) == 1:
        return _round_up(shape[0] * itemsize, 512)
    lead = 1
    for s in shape[:-2]:
        lead *= s
    return lead * _round_up(shape[-2], 8) * _round_up(shape[-1], 128) * itemsize


def _default_compute_dtype():
    """bf16 MXU/VPU operands on v6e/v7x (accumulation stays f32 in-kernel);
    f32 on v5e and older where bf16 casts cost VPU work for no MXU benefit
    at these shapes."""
    try:
        kind = jax.devices()[0].device_kind.lower()
    except Exception:
        return jnp.float32
    if ("v6" in kind) or ("v7" in kind):
        return jnp.bfloat16
    return jnp.float32


def _pick_batch_tile(B, *, max_length, per_sample, budget):
    """Samples per grid step + number of grid steps.

    Targets >= ~2048 MXU rows per step, caps the tile by the physical-VMEM
    budget, guarantees >= 2 grid steps whenever B >= 2 (so the "parallel"
    batch axis can shard across v7x's two TensorCores), and rebalances so the
    last tile has at most grid-1 padded samples.
    """
    cap = max(1, budget // per_sample)
    desired = max(1, -(-2048 // max_length))        # >= ~2048 MXU rows / step
    tb = max(1, min(desired, cap, B))
    if B > 1 and tb >= B:
        tb = -(-B // 2)                             # force >= 2 grid steps
    grid = -(-B // tb)
    tb = -(-B // grid)                              # rebalance: minimal padding
    grid = -(-B // tb)
    return tb, grid


def _make_kernel(*, seq_len, max_length, num_layers, kernel_size, dilation,
                 pad_size, compute_dtype):
    L0, ML, K, d, p, cd = (seq_len, max_length, kernel_size, dilation,
                           pad_size, compute_dtype)
    # Left pad of the activation scratch = conv zero-pad + module's F.pad-to-ML.
    left = p + (ML - L0)

    def kernel(x_ref, pw_ref, pb_ref, wc_ref, cb_ref, fw_ref, fb_ref,
               out_ref, hp_ref):
        TB = out_ref.shape[0]
        E = pw_ref.shape[1]

        # Zero the pad strips.  Re-done every grid step -> no cross-step
        # scratch state (safe when the "parallel" batch axis is sharded
        # across TensorCores).
        if left > 0:
            hp_ref[:, pl.ds(0, left), :] = jnp.zeros((TB, left, E), cd)
        if p > 0:
            hp_ref[:, pl.ds(p + ML, p), :] = jnp.zeros((TB, p, E), cd)

        # proj_layer over the L0 real tokens only (the module applies F.pad
        # AFTER the projection, so padded positions are exact zeros above).
        x2 = x_ref[...].astype(cd)                               # (TB*L0, T)
        h0 = jnp.dot(x2, pw_ref[...],
                     preferred_element_type=jnp.float32) + pb_ref[...]
        hp_ref[:, pl.ds(left, L0), :] = h0.astype(cd).reshape(TB, L0, E)

        # cnn_stack: num_layers x [dilated Conv1d(E, E, K) + ReLU].  Each
        # layer = K accumulated MXU dots over strided scratch views (no
        # lane-concat, f32 accumulation).
        h = None
        for l in range(num_layers):
            acc = cb_ref[l]                                      # (1, E) f32
            for k in range(K):
                tap = hp_ref[:, pl.ds(k * d, ML), :].reshape(TB * ML, E)
                acc = acc + jnp.dot(tap, wc_ref[l, k],
                                    preferred_element_type=jnp.float32)
            h = jnp.maximum(acc, 0.0)                            # (TB*ML, E)
            if l + 1 < num_layers:       # last layer's output stays in regs
                hp_ref[:, pl.ds(p, ML), :] = h.astype(cd).reshape(TB, ML, E)

        # Global max over the sequence, then fc (Flatten + Linear), written
        # as one lane-dense (TB, 128) f32 block (classes padded to 128 lanes).
        pooled = jnp.max(h.reshape(TB, ML, E), axis=1)           # (TB, E)
        out_ref[...] = jnp.dot(pooled.astype(cd), fw_ref[...],
                               preferred_element_type=jnp.float32) + fb_ref[...]

    return kernel


def cnn_discourse_cls_forward(X, params, *, max_length, num_layers,
                              kernel_size, dilation, pad_size, num_classes,
                              batch_tile=None, compute_dtype=None,
                              vmem_budget_bytes=40 << 20):
    """X: (B, L0, token_size) -> logits (B, num_classes) float32."""
    assert num_layers >= 1
    B, L0, T = X.shape
    E = params["proj_w"].shape[1]
    K, ML, p = kernel_size, max_length, pad_size
    assert L0 <= ML
    # TODO(synk): only the length-preserving conv case (2*pad == (K-1)*dil,
    # i.e. the default kernel_size=3) is implemented; larger kernel sizes
    # shrink the sequence per layer in the PyTorch module.
    assert 2 * pad_size == (kernel_size - 1) * dilation

    cd = compute_dtype if compute_dtype is not None else _default_compute_dtype()
    cdi = jnp.dtype(cd).itemsize
    xi = jnp.dtype(X.dtype).itemsize
    ncp = _round_up(max(num_classes, 1), 128)          # lane-dense output width

    # Physical (8,128)-tiled VMEM bytes per sample and for the weights.
    per_sample = (2 * _phys((L0, T), xi)               # double-buffered X block
                  + _phys((ML + 2 * p, E), cdi)        # padded-act scratch
                  + 6 * _phys((ML, E), 4)              # f32 temporaries slack
                  + 2 * _phys((1, ncp), 4))            # double-buffered output
    w_bytes = 2 * (_phys((T, E), cdi) + _phys((1, E), 4)
                   + _phys((num_layers, K, E, E), cdi)
                   + _phys((num_layers, 1, E), 4)
                   + _phys((E, ncp), cdi) + _phys((1, ncp), 4))

    if batch_tile is not None:
        tb = max(1, min(batch_tile, B))
        grid = -(-B // tb)
    else:
        tb, grid = _pick_batch_tile(B, max_length=ML, per_sample=per_sample,
                                    budget=vmem_budget_bytes - w_bytes)
    Bp = tb * grid

    # Scoped-VMEM limit derived from the tile budget (defaults are only
    # 16 MiB on v5e / 32 MiB on v6e+); capped at v7x's 64 MiB physical.
    vmem_limit = int(min(64 << 20,
                         max(32 << 20,
                             2 * (tb * per_sample + w_bytes) + (4 << 20))))

    # Only the cheap batch-remainder pad; no sequence pad, no dtype cast of X.
    Xg = jnp.pad(X, ((0, Bp - B), (0, 0), (0, 0))).reshape(grid, tb * L0, T)

    proj_w = params["proj_w"].astype(cd)                        # (T, E)
    proj_b = params["proj_b"].astype(jnp.float32)               # (1, E)
    conv_w = params["conv_w"].astype(cd)                        # (L, K, E, E)
    conv_b = params["conv_b"].astype(jnp.float32)               # (L, 1, E)
    fc_w = jnp.pad(params["fc_w"],
                   ((0, 0), (0, ncp - num_classes))).astype(cd)  # (E, ncp)
    fc_b = jnp.pad(params["fc_b"],
                   ((0, 0), (0, ncp - num_classes))).astype(jnp.float32)

    kernel = _make_kernel(seq_len=L0, max_length=ML, num_layers=num_layers,
                          kernel_size=K, dilation=dilation, pad_size=p,
                          compute_dtype=cd)

    def const_spec(shape):
        # Weights/biases: full block, constant index_map -> DMA'd once and
        # reused by every grid step.
        # TODO(synk): pipeline_mode=pl.Buffered(1) would drop the unused
        # second pipeline buffer for these (~tens of KiB of VMEM).
        return pl.BlockSpec(shape, lambda b: (0,) * len(shape))

    out = pl.pallas_call(
        kernel,
        out_shape=jax.ShapeDtypeStruct((grid, tb, ncp), jnp.float32),
        grid=(grid,),
        in_specs=[
            pl.BlockSpec((None, tb * L0, T), lambda b: (b, 0, 0)),   # X tile
            const_spec((T, E)),                                      # proj_w
            const_spec((1, E)),                                      # proj_b
            const_spec((num_layers, K, E, E)),                       # conv_w
            const_spec((num_layers, 1, E)),                          # conv_b
            const_spec((E, ncp)),                                    # fc_w
            const_spec((1, ncp)),                                    # fc_b
        ],
        out_specs=pl.BlockSpec((None, tb, ncp), lambda b: (b, 0, 0)),
        scratch_shapes=[
            pltpu.VMEM((tb, ML + 2 * p, E), cd),      # padded activations
        ],
        # TODO(synk): on v7x, profile whether "parallel" actually shards the
        # batch grid axis across the two TensorCores; if not, switch to an
        # explicit CORE_PARALLEL leading axis / pl.core_map split.
        compiler_params=pltpu.CompilerParams(
            dimension_semantics=("parallel",),
            vmem_limit_bytes=vmem_limit),
    )(Xg, proj_w, proj_b, conv_w, conv_b, fc_w, fc_b)

    return out.reshape(Bp, ncp)[:B, :num_classes]


def init_params(key, *, token_size, embed_size, num_layers, kernel_size,
                num_classes):
    ks = jax.random.split(key, 6)
    return dict(
        # nn.Linear(token_size, embed_size): stored as (in, out)
        proj_w=jax.random.normal(ks[0], (token_size, embed_size),
                                 jnp.float32) / math.sqrt(token_size),
        proj_b=jax.random.normal(ks[1], (1, embed_size), jnp.float32) * 0.02,
        # Conv1d weight (C_out, C_in, K) stored as (layer, K, C_in, C_out)
        conv_w=jax.random.normal(
            ks[2], (num_layers, kernel_size, embed_size, embed_size),
            jnp.float32) / math.sqrt(kernel_size * embed_size),
        conv_b=jax.random.normal(ks[3], (num_layers, 1, embed_size),
                                 jnp.float32) * 0.02,
        # fc: nn.Linear(embed_size, num_classes)
        fc_w=jax.random.normal(ks[4], (embed_size, num_classes),
                               jnp.float32) / math.sqrt(embed_size),
        fc_b=jax.random.normal(ks[5], (1, num_classes), jnp.float32) * 0.02,
    )


def reference_forward(X, params, *, max_length, num_layers, kernel_size,
                      dilation, pad_size):
    """Pure-JAX reference reproducing the PyTorch forward (labels=None)."""
    h = X @ params["proj_w"] + params["proj_b"][0]
    pad_sum = max_length - h.shape[1]
    h = jnp.pad(h, ((0, 0), (pad_sum, 0), (0, 0)))
    for l in range(num_layers):
        h = jax.lax.conv_general_dilated(
            h, params["conv_w"][l],
            window_strides=(1,), padding=[(pad_size, pad_size)],
            rhs_dilation=(dilation,),
            dimension_numbers=("NWC", "WIO", "NWC"))
        h = jnp.maximum(h + params["conv_b"][l][0], 0.0)
    pooled = h.max(axis=1)
    return pooled @ params["fc_w"] + params["fc_b"][0]


if __name__ == "__main__":
    # Module hyperparameters (forward with labels=None -> logits only).
    # TODO(synk): CrossEntropyLoss branch (labels is not None) and the
    # onehot_embed / Identity-projection branches are not implemented.
    length = 6            # -> max_length = 8, num_layers = 3
    token_size = 32
    embed_size = 32
    num_classes = 4
    kernel_size = 3
    batch = 16

    max_length = 2 ** math.ceil(math.log2(length))
    num_layers = math.ceil(math.log2(length))
    dilation = kernel_size // 2
    pad_size = kernel_size // 2 + 2 ** dilation - 2 * dilation

    key = jax.random.PRNGKey(0)
    k_x, k_x2, k_p = jax.random.split(key, 3)
    X = jax.random.normal(k_x, (batch, length, token_size), jnp.float32)
    params = init_params(k_p, token_size=token_size, embed_size=embed_size,
                         num_layers=num_layers, kernel_size=kernel_size,
                         num_classes=num_classes)

    run = functools.partial(cnn_discourse_cls_forward,
                            max_length=max_length, num_layers=num_layers,
                            kernel_size=kernel_size, dilation=dilation,
                            pad_size=pad_size, num_classes=num_classes)
    ref_fn = functools.partial(reference_forward,
                               max_length=max_length, num_layers=num_layers,
                               kernel_size=kernel_size, dilation=dilation,
                               pad_size=pad_size)

    ref = jax.block_until_ready(ref_fn(X, params))

    # 1) f32 compute path (tb=8, grid=2): strict check.
    logits = jax.block_until_ready(run(X, params, compute_dtype=jnp.float32))
    assert logits.shape == (batch, num_classes)
    assert jnp.allclose(logits, ref, rtol=1e-3, atol=1e-3), (logits, ref)

    # 2) Odd batch size: exercises the tile rebalance / batch-remainder pad.
    logits_odd = jax.block_until_ready(
        run(X[:13], params, compute_dtype=jnp.float32))
    assert logits_odd.shape == (13, num_classes)
    assert jnp.allclose(logits_odd, ref[:13], rtol=1e-3, atol=1e-3)

    # 3) Larger batch: exercises the big-tile path (tb=200, grid=3).
    Xb = jax.random.normal(k_x2, (600, length, token_size), jnp.float32)
    refb = jax.block_until_ready(ref_fn(Xb, params))
    logits_big = jax.block_until_ready(
        run(Xb, params, compute_dtype=jnp.float32))
    assert logits_big.shape == (600, num_classes)
    assert jnp.allclose(logits_big, refb, rtol=1e-3, atol=1e-3)

    # 4) bf16 MXU-operand path (default on v6e/v7x); f32 accumulation.
    #    NOTE: intermediate layer activations are also stored in bf16, so
    #    rounding compounds across layers -> loose tolerance vs the f32 ref.
    logits_bf16 = jax.block_until_ready(
        run(X, params, compute_dtype=jnp.bfloat16))
    assert logits_bf16.shape == (batch, num_classes)
    assert jnp.allclose(logits_bf16, ref, rtol=1e-1, atol=1e-1)

    # 5) Auto compute dtype (bf16 on v6e/v7x, f32 otherwise): loose check.
    logits_auto = jax.block_until_ready(run(X, params))
    assert jnp.allclose(logits_auto, ref, rtol=1e-1, atol=1e-1)

    print("KERNEL_OK")
</pallas_src>

<mosaic_0001>
module attributes {stable_mosaic.version = 11 : i64} {
  func.func @kernel(%arg0: i32, %arg1: memref<1x48x32xf32, #tpu.memory_space<vmem>>, %arg2: memref<32x32xf32, #tpu.memory_space<vmem>>, %arg3: memref<1x32xf32, #tpu.memory_space<vmem>>, %arg4: memref<3x3x32x32xf32, #tpu.memory_space<vmem>>, %arg5: memref<3x1x32xf32, #tpu.memory_space<vmem>>, %arg6: memref<32x128xf32, #tpu.memory_space<vmem>>, %arg7: memref<1x128xf32, #tpu.memory_space<vmem>>, %arg8: memref<1x8x128xf32, #tpu.memory_space<vmem>>, %arg9: memref<8x10x32xf32, #tpu.memory_space<vmem>>) attributes {dimension_semantics = [#tpu.dimension_semantics<parallel>], iteration_bounds = array<i64: 2>, scalar_prefetch = 0 : i64, scratch_operands = 1 : i64, tpu.core_type = #tpu.core_type<tc>, window_params = [{transform_indices = @transform_0, window_bounds = array<i64: 1, 48, 32>}, {pipeline_mode = #tpu.pipeline_mode<synchronous>, transform_indices = @transform_1, window_bounds = array<i64: 32, 32>}, {pipeline_mode = #tpu.pipeline_mode<synchronous>, transform_indices = @transform_2, window_bounds = array<i64: 1, 32>}, {pipeline_mode = #tpu.pipeline_mode<synchronous>, transform_indices = @transform_3, window_bounds = array<i64: 3, 3, 32, 32>}, {pipeline_mode = #tpu.pipeline_mode<synchronous>, transform_indices = @transform_4, window_bounds = array<i64: 3, 1, 32>}, {pipeline_mode = #tpu.pipeline_mode<synchronous>, transform_indices = @transform_5, window_bounds = array<i64: 32, 128>}, {pipeline_mode = #tpu.pipeline_mode<synchronous>, transform_indices = @transform_6, window_bounds = array<i64: 1, 128>}, {transform_indices = @transform_7, window_bounds = array<i64: 1, 8, 128>}]} {
    %cst = arith.constant 0.000000e+00 : f32
    %0 = vector.broadcast %cst : f32 to vector<8x3x32xf32>
    %c0 = arith.constant 0 : index
    %c0_0 = arith.constant 0 : index
    %c0_1 = arith.constant 0 : index
    %1 = vector.load %arg9[%c0, %c0_0, %c0_1] : memref<8x10x32xf32, #tpu.memory_space<vmem>>, vector<8x3x32xf32>
    tpu.vector_store %arg9[%c0, %c0_0, %c0_1], %0 {strides = array<i32>} : memref<8x10x32xf32, #tpu.memory_space<vmem>>, vector<8x3x32xf32>,
    %cst_2 = arith.constant 0.000000e+00 : f32
    %2 = vector.broadcast %cst_2 : f32 to vector<8x1x32xf32>
    %c0_3 = arith.constant 0 : index
    %c9 = arith.constant 9 : index
    %c0_4 = arith.constant 0 : index
    %3 = vector.load %arg9[%c0_3, %c9, %c0_4] : memref<8x10x32xf32, #tpu.memory_space<vmem>>, vector<8x1x32xf32>
    tpu.vector_store %arg9[%c0_3, %c9, %c0_4], %2 {strides = array<i32>} : memref<8x10x32xf32, #tpu.memory_space<vmem>>, vector<8x1x32xf32>,
    %c0_5 = arith.constant 0 : index
    %c0_6 = arith.constant 0 : index
    %c0_7 = arith.constant 0 : index
    %4 = vector.load %arg1[%c0_5, %c0_6, %c0_7] : memref<1x48x32xf32, #tpu.memory_space<vmem>>, vector<1x48x32xf32>
    %5 = vector.shape_cast %4 : vector<1x48x32xf32> to vector<48x32xf32>
    %c0_8 = arith.constant 0 : index
    %c0_9 = arith.constant 0 : index
    %6 = vector.load %arg2[%c0_8, %c0_9] : memref<32x32xf32, #tpu.memory_space<vmem>>, vector<32x32xf32>
    %cst_10 = arith.constant dense<0.000000e+00> : vector<48x32xf32>
    %7 = tpu.matmul %5, %6, %cst_10 {dimension_numbers = #tpu.dot_dimension_numbers<[1], [0], [0], [1], [0, 0, 1, 1], [], []>} : vector<48x32xf32>, vector<32x32xf32>, vector<48x32xf32> -> vector<48x32xf32>
    %c0_11 = arith.constant 0 : index
    %c0_12 = arith.constant 0 : index
    %8 = vector.load %arg3[%c0_11, %c0_12] : memref<1x32xf32, #tpu.memory_space<vmem>>, vector<1x32xf32>
    %9 = vector.broadcast %8 : vector<1x32xf32> to vector<48x32xf32>
    %10 = arith.addf %7, %9 : vector<48x32xf32>
    %11 = vector.shape_cast %10 : vector<48x32xf32> to vector<8x6x32xf32>
    %c0_13 = arith.constant 0 : index
    %c3 = arith.constant 3 : index
    %c0_14 = arith.constant 0 : index
    %12 = vector.load %arg9[%c0_13, %c3, %c0_14] : memref<8x10x32xf32, #tpu.memory_space<vmem>>, vector<8x6x32xf32>
    tpu.vector_store %arg9[%c0_13, %c3, %c0_14], %11 {strides = array<i32>} : memref<8x10x32xf32, #tpu.memory_space<vmem>>, vector<8x6x32xf32>,
    %c0_15 = arith.constant 0 : index
    %c0_16 = arith.constant 0 : index
    %c0_17 = arith.constant 0 : index
    %13 = vector.load %arg5[%c0_15, %c0_16, %c0_17] : memref<3x1x32xf32, #tpu.memory_space<vmem>>, vector<1x1x32xf32>
    %14 = vector.shape_cast %13 : vector<1x1x32xf32> to vector<1x32xf32>
    %c0_18 = arith.constant 0 : index
    %c0_19 = arith.constant 0 : index
    %c0_20 = arith.constant 0 : index
    %15 = vector.load %arg9[%c0_18, %c0_19, %c0_20] : memref<8x10x32xf32, #tpu.memory_space<vmem>>, vector<8x8x32xf32>
    %16 = vector.shape_cast %15 : vector<8x8x32xf32> to vector<64x32xf32>
    %c0_21 = arith.constant 0 : index
    %c0_22 = arith.constant 0 : index
    %c0_23 = arith.constant 0 : index
    %c0_24 = arith.constant 0 : index
    %17 = vector.load %arg4[%c0_21, %c0_22, %c0_23, %c0_24] : memref<3x3x32x32xf32, #tpu.memory_space<vmem>>, vector<1x1x32x32xf32>
    %18 = vector.shape_cast %17 : vector<1x1x32x32xf32> to vector<32x32xf32>
    %cst_25 = arith.constant dense<0.000000e+00> : vector<64x32xf32>
    %19 = tpu.matmul %16, %18, %cst_25 {dimension_numbers = #tpu.dot_dimension_numbers<[1], [0], [0], [1], [0, 0, 1, 1], [], []>} : vector<64x32xf32>, vector<32x32xf32>, vector<64x32xf32> -> vector<64x32xf32>
    %20 = vector.broadcast %14 : vector<1x32xf32> to vector<64x32xf32>
    %21 = arith.addf %20, %19 : vector<64x32xf32>
    %c0_26 = arith.constant 0 : index
    %c1 = arith.constant 1 : index
    %c0_27 = arith.constant 0 : index
    %22 = vector.load %arg9[%c0_26, %c1, %c0_27] : memref<8x10x32xf32, #tpu.memory_space<vmem>>, vector<8x8x32xf32>
    %23 = vector.shape_cast %22 : vector<8x8x32xf32> to vector<64x32xf32>
    %c0_28 = arith.constant 0 : index
    %c1_29 = arith.constant 1 : index
    %c0_30 = arith.constant 0 : index
    %c0_31 = arith.constant 0 : index
    %24 = vector.load %arg4[%c0_28, %c1_29, %c0_30, %c0_31] : memref<3x3x32x32xf32, #tpu.memory_space<vmem>>, vector<1x1x32x32xf32>
    %25 = vector.shape_cast %24 : vector<1x1x32x32xf32> to vector<32x32xf32>
    %cst_32 = arith.constant dense<0.000000e+00> : vector<64x32xf32>
    %26 = tpu.matmul %23, %25, %cst_32 {dimension_numbers = #tpu.dot_dimension_numbers<[1], [0], [0], [1], [0, 0, 1, 1], [], []>} : vector<64x32xf32>, vector<32x32xf32>, vector<64x32xf32> -> vector<64x32xf32>
    %27 = arith.addf %21, %26 : vector<64x32xf32>
    %c0_33 = arith.constant 0 : index
    %c2 = arith.constant 2 : index
    %c0_34 = arith.constant 0 : index
    %28 = vector.load %arg9[%c0_33, %c2, %c0_34] : memref<8x10x32xf32, #tpu.memory_space<vmem>>, vector<8x8x32xf32>
    %29 = vector.shape_cast %28 : vector<8x8x32xf32> to vector<64x32xf32>
    %c0_35 = arith.constant 0 : index
    %c2_36 = arith.constant 2 : index
    %c0_37 = arith.constant 0 : index
    %c0_38 = arith.constant 0 : index
    %30 = vector.load %arg4[%c0_35, %c2_36, %c0_37, %c0_38] : memref<3x3x32x32xf32, #tpu.memory_space<vmem>>, vector<1x1x32x32xf32>
    %31 = vector.shape_cast %30 : vector<1x1x32x32xf32> to vector<32x32xf32>
    %cst_39 = arith.constant dense<0.000000e+00> : vector<64x32xf32>
    %32 = tpu.matmul %29, %31, %cst_39 {dimension_numbers = #tpu.dot_dimension_numbers<[1], [0], [0], [1], [0, 0, 1, 1], [], []>} : vector<64x32xf32>, vector<32x32xf32>, vector<64x32xf32> -> vector<64x32xf32>
    %33 = arith.addf %27, %32 : vector<64x32xf32>
    %cst_40 = arith.constant 0.000000e+00 : f32
    %34 = vector.broadcast %cst_40 : f32 to vector<64x32xf32>
    %35 = arith.maximumf %33, %34 : vector<64x32xf32>
    %36 = vector.shape_cast %35 : vector<64x32xf32> to vector<8x8x32xf32>
    %c0_41 = arith.constant 0 : index
    %c1_42 = arith.constant 1 : index
    %c0_43 = arith.constant 0 : index
    %37 = vector.load %arg9[%c0_41, %c1_42, %c0_43] : memref<8x10x32xf32, #tpu.memory_space<vmem>>, vector<8x8x32xf32>
    tpu.vector_store %arg9[%c0_41, %c1_42, %c0_43], %36 {strides = array<i32>} : memref<8x10x32xf32, #tpu.memory_space<vmem>>, vector<8x8x32xf32>,
    %c1_44 = arith.constant 1 : index
    %c0_45 = arith.constant 0 : index
    %c0_46 = arith.constant 0 : index
    %38 = vector.load %arg5[%c1_44, %c0_45, %c0_46] : memref<3x1x32xf32, #tpu.memory_space<vmem>>, vector<1x1x32xf32>
    %39 = vector.shape_cast %38 : vector<1x1x32xf32> to vector<1x32xf32>
    %c0_47 = arith.constant 0 : index
    %c0_48 = arith.constant 0 : index
    %c0_49 = arith.constant 0 : index
    %40 = vector.load %arg9[%c0_47, %c0_48, %c0_49] : memref<8x10x32xf32, #tpu.memory_space<vmem>>, vector<8x8x32xf32>
    %41 = vector.shape_cast %40 : vector<8x8x32xf32> to vector<64x32xf32>
    %c1_50 = arith.constant 1 : index
    %c0_51 = arith.constant 0 : index
    %c0_52 = arith.constant 0 : index
    %c0_53 = arith.constant 0 : index
    %42 = vector.load %arg4[%c1_50, %c0_51, %c0_52, %c0_53] : memref<3x3x32x32xf32, #tpu.memory_space<vmem>>, vector<1x1x32x32xf32>
    %43 = vector.shape_cast %42 : vector<1x1x32x32xf32> to vector<32x32xf32>
    %cst_54 = arith.constant dense<0.000000e+00> : vector<64x32xf32>
    %44 = tpu.matmul %41, %43, %cst_54 {dimension_numbers = #tpu.dot_dimension_numbers<[1], [0], [0], [1], [0, 0, 1, 1], [], []>} : vector<64x32xf32>, vector<32x32xf32>, vector<64x32xf32> -> vector<64x32xf32>
    %45 = vector.broadcast %39 : vector<1x32xf32> to vector<64x32xf32>
    %46 = arith.addf %45, %44 : vector<64x32xf32>
    %c0_55 = arith.constant 0 : index
    %c1_56 = arith.constant 1 : index
    %c0_57 = arith.constant 0 : index
    %47 = vector.load %arg9[%c0_55, %c1_56, %c0_57] : memref<8x10x32xf32, #tpu.memory_space<vmem>>, vector<8x8x32xf32>
    %48 = vector.shape_cast %47 : vector<8x8x32xf32> to vector<64x32xf32>
    %c1_58 = arith.constant 1 : index
    %c1_59 = arith.constant 1 : index
    %c0_60 = arith.constant 0 : index
    %c0_61 = arith.constant 0 : index
    %49 = vector.load %arg4[%c1_58, %c1_59, %c0_60, %c0_61] : memref<3x3x32x32xf32, #tpu.memory_space<vmem>>, vector<1x1x32x32xf32>
    %50 = vector.shape_cast %49 : vector<1x1x32x32xf32> to vector<32x32xf32>
    %cst_62 = arith.constant dense<0.000000e+00> : vector<64x32xf32>
    %51 = tpu.matmul %48, %50, %cst_62 {dimension_numbers = #tpu.dot_dimension_numbers<[1], [0], [0], [1], [0, 0, 1, 1], [], []>} : vector<64x32xf32>, vector<32x32xf32>, vector<64x32xf32> -> vector<64x32xf32>
    %52 = arith.addf %46, %51 : vector<64x32xf32>
    %c0_63 = arith.constant 0 : index
    %c2_64 = arith.constant 2 : index
    %c0_65 = arith.constant 0 : index
    %53 = vector.load %arg9[%c0_63, %c2_64, %c0_65] : memref<8x10x32xf32, #tpu.memory_space<vmem>>, vector<8x8x32xf32>
    %54 = vector.shape_cast %53 : vector<8x8x32xf32> to vector<64x32xf32>
    %c1_66 = arith.constant 1 : index
    %c2_67 = arith.constant 2 : index
    %c0_68 = arith.constant 0 : index
    %c0_69 = arith.constant 0 : index
    %55 = vector.load %arg4[%c1_66, %c2_67, %c0_68, %c0_69] : memref<3x3x32x32xf32, #tpu.memory_space<vmem>>, vector<1x1x32x32xf32>
    %56 = vector.shape_cast %55 : vector<1x1x32x32xf32> to vector<32x32xf32>
    %cst_70 = arith.constant dense<0.000000e+00> : vector<64x32xf32>
    %57 = tpu.matmul %54, %56, %cst_70 {dimension_numbers = #tpu.dot_dimension_numbers<[1], [0], [0], [1], [0, 0, 1, 1], [], []>} : vector<64x32xf32>, vector<32x32xf32>, vector<64x32xf32> -> vector<64x32xf32>
    %58 = arith.addf %52, %57 : vector<64x32xf32>
    %cst_71 = arith.constant 0.000000e+00 : f32
    %59 = vector.broadcast %cst_71 : f32 to vector<64x32xf32>
    %60 = arith.maximumf %58, %59 : vector<64x32xf32>
    %61 = vector.shape_cast %60 : vector<64x32xf32> to vector<8x8x32xf32>
    %c0_72 = arith.constant 0 : index
    %c1_73 = arith.constant 1 : index
    %c0_74 = arith.constant 0 : index
    %62 = vector.load %arg9[%c0_72, %c1_73, %c0_74] : memref<8x10x32xf32, #tpu.memory_space<vmem>>, vector<8x8x32xf32>
    tpu.vector_store %arg9[%c0_72, %c1_73, %c0_74], %61 {strides = array<i32>} : memref<8x10x32xf32, #tpu.memory_space<vmem>>, vector<8x8x32xf32>,
    %c2_75 = arith.constant 2 : index
    %c0_76 = arith.constant 0 : index
    %c0_77 = arith.constant 0 : index
    %63 = vector.load %arg5[%c2_75, %c0_76, %c0_77] : memref<3x1x32xf32, #tpu.memory_space<vmem>>, vector<1x1x32xf32>
    %64 = vector.shape_cast %63 : vector<1x1x32xf32> to vector<1x32xf32>
    %c0_78 = arith.constant 0 : index
    %c0_79 = arith.constant 0 : index
    %c0_80 = arith.constant 0 : index
    %65 = vector.load %arg9[%c0_78, %c0_79, %c0_80] : memref<8x10x32xf32, #tpu.memory_space<vmem>>, vector<8x8x32xf32>
    %66 = vector.shape_cast %65 : vector<8x8x32xf32> to vector<64x32xf32>
    %c2_81 = arith.constant 2 : index
    %c0_82 = arith.constant 0 : index
    %c0_83 = arith.constant 0 : index
    %c0_84 = arith.constant 0 : index
    %67 = vector.load %arg4[%c2_81, %c0_82, %c0_83, %c0_84] : memref<3x3x32x32xf32, #tpu.memory_space<vmem>>, vector<1x1x32x32xf32>
    %68 = vector.shape_cast %67 : vector<1x1x32x32xf32> to vector<32x32xf32>
    %cst_85 = arith.constant dense<0.000000e+00> : vector<64x32xf32>
    %69 = tpu.matmul %66, %68, %cst_85 {dimension_numbers = #tpu.dot_dimension_numbers<[1], [0], [0], [1], [0, 0, 1, 1], [], []>} : vector<64x32xf32>, vector<32x32xf32>, vector<64x32xf32> -> vector<64x32xf32>
    %70 = vector.broadcast %64 : vector<1x32xf32> to vector<64x32xf32>
    %71 = arith.addf %70, %69 : vector<64x32xf32>
    %c0_86 = arith.constant 0 : index
    %c1_87 = arith.constant 1 : index
    %c0_88 = arith.constant 0 : index
    %72 = vector.load %arg9[%c0_86, %c1_87, %c0_88] : memref<8x10x32xf32, #tpu.memory_space<vmem>>, vector<8x8x32xf32>
    %73 = vector.shape_cast %72 : vector<8x8x32xf32> to vector<64x32xf32>
    %c2_89 = arith.constant 2 : index
    %c1_90 = arith.constant 1 : index
    %c0_91 = arith.constant 0 : index
    %c0_92 = arith.constant 0 : index
    %74 = vector.load %arg4[%c2_89, %c1_90, %c0_91, %c0_92] : memref<3x3x32x32xf32, #tpu.memory_space<vmem>>, vector<1x1x32x32xf32>
    %75 = vector.shape_cast %74 : vector<1x1x32x32xf32> to vector<32x32xf32>
    %cst_93 = arith.constant dense<0.000000e+00> : vector<64x32xf32>
    %76 = tpu.matmul %73, %75, %cst_93 {dimension_numbers = #tpu.dot_dimension_numbers<[1], [0], [0], [1], [0, 0, 1, 1], [], []>} : vector<64x32xf32>, vector<32x32xf32>, vector<64x32xf32> -> vector<64x32xf32>
    %77 = arith.addf %71, %76 : vector<64x32xf32>
    %c0_94 = arith.constant 0 : index
    %c2_95 = arith.constant 2 : index
    %c0_96 = arith.constant 0 : index
    %78 = vector.load %arg9[%c0_94, %c2_95, %c0_96] : memref<8x10x32xf32, #tpu.memory_space<vmem>>, vector<8x8x32xf32>
    %79 = vector.shape_cast %78 : vector<8x8x32xf32> to vector<64x32xf32>
    %c2_97 = arith.constant 2 : index
    %c2_98 = arith.constant 2 : index
    %c0_99 = arith.constant 0 : index
    %c0_100 = arith.constant 0 : index
    %80 = vector.load %arg4[%c2_97, %c2_98, %c0_99, %c0_100] : memref<3x3x32x32xf32, #tpu.memory_space<vmem>>, vector<1x1x32x32xf32>
    %81 = vector.shape_cast %80 : vector<1x1x32x32xf32> to vector<32x32xf32>
    %cst_101 = arith.constant dense<0.000000e+00> : vector<64x32xf32>
    %82 = tpu.matmul %79, %81, %cst_101 {dimension_numbers = #tpu.dot_dimension_numbers<[1], [0], [0], [1], [0, 0, 1, 1], [], []>} : vector<64x32xf32>, vector<32x32xf32>, vector<64x32xf32> -> vector<64x32xf32>
    %83 = arith.addf %77, %82 : vector<64x32xf32>
    %cst_102 = arith.constant 0.000000e+00 : f32
    %84 = vector.broadcast %cst_102 : f32 to vector<64x32xf32>
    %85 = arith.maximumf %83, %84 : vector<64x32xf32>
    %86 = vector.shape_cast %85 : vector<64x32xf32> to vector<8x8x32xf32>
    %cst_103 = arith.constant dense<0xFF800000> : vector<8x32xf32>
    %87 = vector.multi_reduction <maximumf>, %86, %cst_103 [1] : vector<8x8x32xf32> to vector<8x32xf32>
    %c0_104 = arith.constant 0 : index
    %c0_105 = arith.constant 0 : index
    %88 = vector.load %arg6[%c0_104, %c0_105] : memref<32x128xf32, #tpu.memory_space<vmem>>, vector<32x128xf32>
    %cst_106 = arith.constant dense<0.000000e+00> : vector<8x128xf32>
    %89 = tpu.matmul %87, %88, %cst_106 {dimension_numbers = #tpu.dot_dimension_numbers<[1], [0], [0], [1], [0, 0, 1, 1], [], []>} : vector<8x32xf32>, vector<32x128xf32>, vector<8x128xf32> -> vector<8x128xf32>
    %c0_107 = arith.constant 0 : index
    %c0_108 = arith.constant 0 : index
    %90 = vector.load %arg7[%c0_107, %c0_108] : memref<1x128xf32, #tpu.memory_space<vmem>>, vector<1x128xf32>
    %91 = vector.broadcast %90 : vector<1x128xf32> to vector<8x128xf32>
    %92 = arith.addf %89, %91 : vector<8x128xf32>
    %c0_109 = arith.constant 0 : index
    %c0_110 = arith.constant 0 : index
    %c0_111 = arith.constant 0 : index
    %93 = vector.load %arg8[%c0_109, %c0_110, %c0_111] : memref<1x8x128xf32, #tpu.memory_space<vmem>>, vector<1x8x128xf32>
    %94 = vector.shape_cast %93 : vector<1x8x128xf32> to vector<8x128xf32>
    %95 = vector.shape_cast %92 : vector<8x128xf32> to vector<1x8x128xf32>
    tpu.vector_store %arg8[%c0_109, %c0_110, %c0_111], %95 {strides = array<i32>} : memref<1x8x128xf32, #tpu.memory_space<vmem>>, vector<1x8x128xf32>,
    return
  }
  func.func @transform_0(%arg0: i32) -> (i32, i32, i32) {
    %c0_i32 = arith.constant 0 : i32
    %c0_i32_0 = arith.constant 0 : i32
    %c0_i32_1 = arith.constant 0 : i32
    return %arg0, %c0_i32, %c0_i32_0 : i32, i32, i32
  }
  func.func @transform_1(%arg0: i32) -> (i32, i32) {
    %c0_i32 = arith.constant 0 : i32
    %c0_i32_0 = arith.constant 0 : i32
    %c0_i32_1 = arith.constant 0 : i32
    return %c0_i32, %c0_i32_0 : i32, i32
  }
  func.func @transform_2(%arg0: i32) -> (i32, i32) {
    %c0_i32 = arith.constant 0 : i32
    %c0_i32_0 = arith.constant 0 : i32
    %c0_i32_1 = arith.constant 0 : i32
    return %c0_i32, %c0_i32_0 : i32, i32
  }
  func.func @transform_3(%arg0: i32) -> (i32, i32, i32, i32) {
    %c0_i32 = arith.constant 0 : i32
    %c0_i32_0 = arith.constant 0 : i32
    %c0_i32_1 = arith.constant 0 : i32
    %c0_i32_2 = arith.constant 0 : i32
    %c0_i32_3 = arith.constant 0 : i32
    return %c0_i32, %c0_i32_0, %c0_i32_1, %c0_i32_2 : i32, i32, i32, i32
  }
  func.func @transform_4(%arg0: i32) -> (i32, i32, i32) {
    %c0_i32 = arith.constant 0 : i32
    %c0_i32_0 = arith.constant 0 : i32
    %c0_i32_1 = arith.constant 0 : i32
    %c0_i32_2 = arith.constant 0 : i32
    return %c0_i32, %c0_i32_0, %c0_i32_1 : i32, i32, i32
  }
  func.func @transform_5(%arg0: i32) -> (i32, i32) {
    %c0_i32 = arith.constant 0 : i32
    %c0_i32_0 = arith.constant 0 : i32
    %c0_i32_1 = arith.constant 0 : i32
    return %c0_i32, %c0_i32_0 : i32, i32
  }
  func.func @transform_6(%arg0: i32) -> (i32, i32) {
    %c0_i32 = arith.constant 0 : i32
    %c0_i32_0 = arith.constant 0 : i32
    %c0_i32_1 = arith.constant 0 : i32
    return %c0_i32, %c0_i32_0 : i32, i32
  }
  func.func @transform_7(%arg0: i32) -> (i32, i32, i32) {
    %c0_i32 = arith.constant 0 : i32
    %c0_i32_0 = arith.constant 0 : i32
    %c0_i32_1 = arith.constant 0 : i32
    return %arg0, %c0_i32, %c0_i32_0 : i32, i32, i32
  }
}

</mosaic_0001>

<llo_original>
// kernel: tpu_custom_call.1
$region0: #{tpu_custom_call.1}
  #allocation0 [shape = 'u32[]', space=smem, size = 0x4, offset = 0x4, fixed_abs, tag = 'smem constant byte address 0x4 - core index']
  #allocation1 [shape = 'u32[144,128]{1,0:T(1,128)}', space=vmem, size = 0x12000, scoped, tag = 'internal scratch']
  #allocation2 [shape = 'f32[8,10,32]{2,1,0:T(8,128)}', space=vmem, size = 0x10000, scoped, tag = 'scratch operand']
  %s0 = inlined_call_operand.vmem [shape: f32[2,48,32], index: 0, kind: input, shape index: {}]
  %s1 = inlined_call_operand.vmem [shape: f32[32,32], index: 1, kind: input, shape index: {}]
  %s2 = inlined_call_operand.vmem [shape: f32[1,32], index: 2, kind: input, shape index: {}]
  %s3 = inlined_call_operand.hbm [shape: f32[3,3,32,32], index: 3, kind: input, shape index: {}]
  %s4 = inlined_call_operand.vmem [shape: f32[3,1,32], index: 4, kind: input, shape index: {}]
  %s5 = inlined_call_operand.vmem [shape: f32[32,128], index: 5, kind: input, shape index: {}]
  %s6 = inlined_call_operand.vmem [shape: f32[1,128], index: 6, kind: input, shape index: {}]
  %s7 = inlined_call_operand.hbm [shape: f32[2,8,128], index: 7, kind: output, shape index: {}]
  %s8 = sld [smem:[#allocation0]]
  $region65: #{tpu_custom_call.1} parent=0
    _
  %s10 = ssub.s32 1, %s8
  %s11 = scalar_select 0, %s10, %s8
  $region1: #{tpu_custom_call.1} parent=0
    #allocation3 [shape = 'u8[147456]{0}', space=vmem, size = 0x24000, scoped, tag = 'input window, operand 3, single buffered']
    #allocation4 [shape = 's32[2]{0}', space=sflag, size = 0x8, scoped, tag = 'scoped memory for tpu_custom_call.1']
    #allocation5 [shape = 's32[2]{0}', space=sflag, size = 0x8, scoped, tag = 'scoped memory for tpu_custom_call.1']
    #allocation6 [shape = 'u8[8192]{0}', space=vmem, size = 0x2000, scoped, tag = 'output window, operand 0']
    %12 = vsyncpa [#allocation4], 0
    %13 = vsyncpa [#allocation5], 0
    %s14 = scalar_lea.sflag [#allocation5], 1
    %15 = vsyncpa %s14, 0
    loop: start=0, step=1, limit=4
    $region2: #{tpu_custom_call.1} parent=1 // loop_pre_header
      _
    $region3: #{tpu_custom_call.1} parent=1 // loop_header
      %s17 = sphi 0, %s21
      %p18 = scmp.ge.s32.totalorder %s17, 4
      %s27 = sphi 0, %s29
      %s30 = sphi 0, %s27
      %s31 = sphi 0, %s30
      %s47 = sphi 0, %s31
      %s51 = sphi 0, %s51
      %s53 = sphi 0, %s51
      %s54 = sphi 0, %s53
      %s68 = sphi 0, %s54
      %s72 = sphi 0, %s72
      %s74 = sphi 0, %s72
      %s75 = sphi 0, %s74
      %s89 = sphi 0, %s75
      %s93 = sphi 0, %s93
      %s95 = sphi 0, %s93
      %s96 = sphi 0, %s95
      %s110 = sphi 0, %s96
      %s114 = sphi 0, %s114
      %s116 = sphi 0, %s114
      %s117 = sphi 0, %s116
      %s131 = sphi 0, %s117
      %s135 = sphi 0, %s135
      %s137 = sphi 0, %s135
      %s138 = sphi 0, %s137
      %s152 = sphi 0, %s138
      %s156 = sphi 0, %s156
      %s158 = sphi 0, %s156
      %s159 = sphi 0, %s158
      %s173 = sphi 0, %s159
      %s179 = sphi 0, %s181
      %s182 = sphi 0, %s179
      %s183 = sphi 0, %s182
      %s199 = sphi 0, %s183
    $region4: #{tpu_custom_call.1} parent=1 // loop_header_branch
      %20 = sbr.rel (%p18) target = $region8
    $region5: #{tpu_custom_call.1} parent=1 // loop_body
      %s22 = ssub.s32 %s17, 1
      %s23 = ssub.s32 %s17, 2
      %s24 = sadd.s32 %s17, 1
      %s25 = ssub.s32 %s17, %s24
      %p26 = scmp.eq.s32.totalorder %s25, 0
      %s28 = sadd.s32 %s27, 1
      %s29 = scalar_select %p26, %s27, %s28
      %p32 = pneg %p26
      %p33 = scmp.eq.s32.totalorder %s17, 1
      %p34 = por %p32, %p33
      %p35 = scmp.ne.s32.totalorder %s27, %s30
      %p36 = scmp.eq.s32.totalorder %s17, 0
      %p37 = por %p35, %p36
      %p38 = scmp.ne.s32.totalorder %s27, %s30
      %p39 = scmp.eq.s32.totalorder %s22, 1
      %p40 = por %p38, %p39
      %p41 = scmp.ne.s32.totalorder %s30, %s31
      %p42 = scmp.eq.s32.totalorder %s22, 0
      %p43 = por %p41, %p42
      %p44 = scmp.ne.s32.totalorder %s30, %s31
      %p45 = scmp.eq.s32.totalorder %s23, 1
      %p46 = por %p44, %p45
      %p48 = scmp.ne.s32.totalorder %s31, %s47
      %p49 = scmp.eq.s32.totalorder %s23, 0
      %p50 = por %p48, %p49
      %s52 = sadd.s32 %s51, 1
      %p55 = scmp.eq.s32.totalorder %s17, 1
      %p56 = scmp.ne.s32.totalorder %s51, %s53
      %p57 = scmp.eq.s32.totalorder %s17, 0
      %p58 = por %p56, %p57
      %p59 = scmp.ne.s32.totalorder %s51, %s53
      %p60 = scmp.eq.s32.totalorder %s22, 1
      %p61 = por %p59, %p60
      %p62 = scmp.ne.s32.totalorder %s53, %s54
      %p63 = scmp.eq.s32.totalorder %s22, 0
      %p64 = por %p62, %p63
      %p65 = scmp.ne.s32.totalorder %s53, %s54
      %p66 = scmp.eq.s32.totalorder %s23, 1
      %p67 = por %p65, %p66
      %p69 = scmp.ne.s32.totalorder %s54, %s68
      %p70 = scmp.eq.s32.totalorder %s23, 0
      %p71 = por %p69, %p70
      %s73 = sadd.s32 %s72, 1
      %p76 = scmp.eq.s32.totalorder %s17, 1
      %p77 = scmp.ne.s32.totalorder %s72, %s74
      %p78 = scmp.eq.s32.totalorder %s17, 0
      %p79 = por %p77, %p78
      %p80 = scmp.ne.s32.totalorder %s72, %s74
      %p81 = scmp.eq.s32.totalorder %s22, 1
      %p82 = por %p80, %p81
      %p83 = scmp.ne.s32.totalorder %s74, %s75
      %p84 = scmp.eq.s32.totalorder %s22, 0
      %p85 = por %p83, %p84
      %p86 = scmp.ne.s32.totalorder %s74, %s75
      %p87 = scmp.eq.s32.totalorder %s23, 1
      %p88 = por %p86, %p87
      %p90 = scmp.ne.s32.totalorder %s75, %s89
      %p91 = scmp.eq.s32.totalorder %s23, 0
      %p92 = por %p90, %p91
      %s94 = sadd.s32 %s93, 1
      %p97 = scmp.eq.s32.totalorder %s17, 1
      %p98 = scmp.ne.s32.totalorder %s93, %s95
      %p99 = scmp.eq.s32.totalorder %s17, 0
      %p100 = por %p98, %p99
      %p101 = scmp.ne.s32.totalorder %s93, %s95
      %p102 = scmp.eq.s32.totalorder %s22, 1
      %p103 = por %p101, %p102
      %p104 = scmp.ne.s32.totalorder %s95, %s96
      %p105 = scmp.eq.s32.totalorder %s22, 0
      %p106 = por %p104, %p105
      %p107 = scmp.ne.s32.totalorder %s95, %s96
      %p108 = scmp.eq.s32.totalorder %s23, 1
      %p109 = por %p107, %p108
      %p111 = scmp.ne.s32.totalorder %s96, %s110
      %p112 = scmp.eq.s32.totalorder %s23, 0
      %p113 = por %p111, %p112
      %s115 = sadd.s32 %s114, 1
      %p118 = scmp.eq.s32.totalorder %s17, 1
      %p119 = scmp.ne.s32.totalorder %s114, %s116
      %p120 = scmp.eq.s32.totalorder %s17, 0
      %p121 = por %p119, %p120
      %p122 = scmp.ne.s32.totalorder %s114, %s116
      %p123 = scmp.eq.s32.totalorder %s22, 1
      %p124 = por %p122, %p123
      %p125 = scmp.ne.s32.totalorder %s116, %s117
      %p126 = scmp.eq.s32.totalorder %s22, 0
      %p127 = por %p125, %p126
      %p128 = scmp.ne.s32.totalorder %s116, %s117
      %p129 = scmp.eq.s32.totalorder %s23, 1
      %p130 = por %p128, %p129
      %p132 = scmp.ne.s32.totalorder %s117, %s131
      %p133 = scmp.eq.s32.totalorder %s23, 0
      %p134 = por %p132, %p133
      %s136 = sadd.s32 %s135, 1
      %p139 = scmp.eq.s32.totalorder %s17, 1
      %p140 = scmp.ne.s32.totalorder %s135, %s137
      %p141 = scmp.eq.s32.totalorder %s17, 0
      %p142 = por %p140, %p141
      %p143 = scmp.ne.s32.totalorder %s135, %s137
      %p144 = scmp.eq.s32.totalorder %s22, 1
      %p145 = por %p143, %p144
      %p146 = scmp.ne.s32.totalorder %s137, %s138
      %p147 = scmp.eq.s32.totalorder %s22, 0
      %p148 = por %p146, %p147
      %p149 = scmp.ne.s32.totalorder %s137, %s138
      %p150 = scmp.eq.s32.totalorder %s23, 1
      %p151 = por %p149, %p150
      %p153 = scmp.ne.s32.totalorder %s138, %s152
      %p154 = scmp.eq.s32.totalorder %s23, 0
      %p155 = por %p153, %p154
      %s157 = sadd.s32 %s156, 1
      %p160 = scmp.eq.s32.totalorder %s17, 1
      %p161 = scmp.ne.s32.totalorder %s156, %s158
      %p162 = scmp.eq.s32.totalorder %s17, 0
      %p163 = por %p161, %p162
      %p164 = scmp.ne.s32.totalorder %s156, %s158
      %p165 = scmp.eq.s32.totalorder %s22, 1
      %p166 = por %p164, %p165
      %p167 = scmp.ne.s32.totalorder %s158, %s159
      %p168 = scmp.eq.s32.totalorder %s22, 0
      %p169 = por %p167, %p168
      %p170 = scmp.ne.s32.totalorder %s158, %s159
      %p171 = scmp.eq.s32.totalorder %s23, 1
      %p172 = por %p170, %p171
      %p174 = scmp.ne.s32.totalorder %s159, %s173
      %p175 = scmp.eq.s32.totalorder %s23, 0
      %p176 = por %p174, %p175
      %s177 = ssub.s32 %s17, %s24
      %p178 = scmp.eq.s32.totalorder %s177, 0
      %s180 = sadd.s32 %s179, 1
      %s181 = scalar_select %p178, %s179, %s180
      %p184 = pneg %p178
      %p185 = scmp.eq.s32.totalorder %s17, 1
      %p186 = por %p184, %p185
      %p187 = scmp.ne.s32.totalorder %s179, %s182
      %p188 = scmp.eq.s32.totalorder %s17, 0
      %p189 = por %p187, %p188
      %p190 = scmp.ne.s32.totalorder %s179, %s182
      %p191 = scmp.eq.s32.totalorder %s22, 1
      %p192 = por %p190, %p191
      %p193 = scmp.ne.s32.totalorder %s182, %s183
      %p194 = scmp.eq.s32.totalorder %s22, 0
      %p195 = por %p193, %p194
      %p196 = scmp.ne.s32.totalorder %s182, %s183
      %p197 = scmp.eq.s32.totalorder %s23, 1
      %p198 = por %p196, %p197
      %p200 = scmp.ne.s32.totalorder %s183, %s199
      %p201 = scmp.eq.s32.totalorder %s23, 0
      %p202 = por %p200, %p201
      %p203 = scmp.le.s32.totalorder 1, %s17
      %p204 = scmp.lt.s32.totalorder %s17, 3
      %p205 = pnand %p203, %p204
      %p206 = pneg %p205
      // Predicated region
      $region9: #{tpu_custom_call.1} parent=5 // pred_check
        _
      $region10: #{tpu_custom_call.1} parent=5 // pred_check_branch
        %208 = sbr.rel (%p205) target = $region12
      $region11: #{tpu_custom_call.1} parent=5 // pred_region
        %s209 = ssub.s32 %s17, 1
        // Predicated region
        $region13: #{tpu_custom_call.1} parent=11 // pred_check
          %p210 = pneg %p64
        $region14: #{tpu_custom_call.1} parent=11 // pred_check_branch
          %212 = sbr.rel (%p210) target = $region16
        $region15: #{tpu_custom_call.1} parent=11 // pred_region
          _
        $region16: #{tpu_custom_call.1} parent=11 // pred_fallthru
          _
        // Predicated region
        $region17: #{tpu_custom_call.1} parent=11 // pred_check
          %p213 = pneg %p85
        $region18: #{tpu_custom_call.1} parent=11 // pred_check_branch
          %215 = sbr.rel (%p213) target = $region20
        $region19: #{tpu_custom_call.1} parent=11 // pred_region
          _
        $region20: #{tpu_custom_call.1} parent=11 // pred_fallthru
          _
        // Predicated region
        $region21: #{tpu_custom_call.1} parent=11 // pred_check
          %p216 = pneg %p106
        $region22: #{tpu_custom_call.1} parent=11 // pred_check_branch
          %218 = sbr.rel (%p216) target = $region24
        $region23: #{tpu_custom_call.1} parent=11 // pred_region
          %s220 = ssub.s32 4608, 4608
          %221 = vsyncadd [#allocation4], %s220
          %s222 = sshll.u32 [#allocation3], 4
          %s223 = int_to_ptr.vmem [resolvable:$true] %s222
          %228 = dma.hbm_to_vmem [thread:$0]  %s3, 4608, %s223, [#allocation4], 128, 128, 8
        $region24: #{tpu_custom_call.1} parent=11 // pred_fallthru
          _
        // Predicated region
        $region25: #{tpu_custom_call.1} parent=11 // pred_check
          %p229 = pneg %p127
        $region26: #{tpu_custom_call.1} parent=11 // pred_check_branch
          %231 = sbr.rel (%p229) target = $region28
        $region27: #{tpu_custom_call.1} parent=11 // pred_region
          _
        $region28: #{tpu_custom_call.1} parent=11 // pred_fallthru
          _
        // Predicated region
        $region29: #{tpu_custom_call.1} parent=11 // pred_check
          %p232 = pneg %p148
        $region30: #{tpu_custom_call.1} parent=11 // pred_check_branch
          %234 = sbr.rel (%p232) target = $region32
        $region31: #{tpu_custom_call.1} parent=11 // pred_region
          _
        $region32: #{tpu_custom_call.1} parent=11 // pred_fallthru
          _
        // Predicated region
        $region33: #{tpu_custom_call.1} parent=11 // pred_check
          %p235 = pneg %p169
        $region34: #{tpu_custom_call.1} parent=11 // pred_check_branch
          %237 = sbr.rel (%p235) target = $region36
        $region35: #{tpu_custom_call.1} parent=11 // pred_region
          _
        $region36: #{tpu_custom_call.1} parent=11 // pred_fallthru
          _
      $region12: #{tpu_custom_call.1} parent=5 // pred_fallthru
        _
      %p238 = scmp.lt.s32.totalorder %s17, 2
      // Predicated region
      $region37: #{tpu_custom_call.1} parent=5 // pred_check
        %p239 = pneg %p238
      $region38: #{tpu_custom_call.1} parent=5 // pred_check_branch
        %241 = sbr.rel (%p239) target = $region40
      $region39: #{tpu_custom_call.1} parent=5 // pred_region
        // Predicated region
        $region41: #{tpu_custom_call.1} parent=39 // pred_check
          %p242 = pneg %p37
        $region42: #{tpu_custom_call.1} parent=39 // pred_check_branch
          %244 = sbr.rel (%p242) target = $region44
        $region43: #{tpu_custom_call.1} parent=39 // pred_region
          %p245 = scmp.lt.s32.totalorder %s17, 1
          %s246 = scalar_select %p245, %s17, 1
          %s247 = smul.addr %s246, 6
          %s248 = smul.addr %s247, 8
          %s249 = scalar_lea.vmem %s0, %s248
        $region44: #{tpu_custom_call.1} parent=39 // pred_fallthru
          _
      $region40: #{tpu_custom_call.1} parent=5 // pred_fallthru
        _
      %p250 = scmp.le.s32.totalorder 1, %s17
      %p251 = scmp.lt.s32.totalorder %s17, 3
      %p252 = pnand %p250, %p251
      %p253 = pneg %p252
      // Predicated region
      $region45: #{tpu_custom_call.1} parent=5 // pred_check
        _
      $region46: #{tpu_custom_call.1} parent=5 // pred_check_branch
        %255 = sbr.rel (%p252) target = $region48
      $region47: #{tpu_custom_call.1} parent=5 // pred_region
        %s256 = ssub.s32 %s17, 1
        // Predicated region
        $region49: #{tpu_custom_call.1} parent=47 // pred_check
          %p257 = pneg %p106
        $region50: #{tpu_custom_call.1} parent=47 // pred_check_branch
          %259 = sbr.rel (%p257) target = $region52
        $region51: #{tpu_custom_call.1} parent=47 // pred_region
          %260 = dma.done [#allocation4], 4608
        $region52: #{tpu_custom_call.1} parent=47 // pred_fallthru
          _
        %p261 = scmp.lt.s32.totalorder %s22, 1
        %s262 = scalar_select %p261, %s22, 1
        %s263 = smul.addr %s262, 6
        %s264 = smul.addr %s263, 8
        %s265 = scalar_lea.vmem %s0, %s264
        %p266 = pneg %p43
        %p267 = pneg %p40
        %p268 = pneg %p64
        %p269 = pneg %p61
        %p270 = pneg %p85
        %p271 = pneg %p82
        %p272 = pneg %p106
        %p273 = pneg %p103
        %p274 = pneg %p127
        %p275 = pneg %p124
        %p276 = pneg %p148
        %p277 = pneg %p145
        %p278 = pneg %p169
        %p279 = pneg %p166
        %p280 = pneg %p195
        %p281 = pneg %p192
        %s282 = sand.u32 %s182, 1
        %s283 = scalar_lea.sflag [#allocation5], %s282
        %s284 = sand.u32 %s182, 1
        %s285 = smul.addr %s284, 8
        %s286 = scalar_lea.vmem [#allocation6], %s285
        %p287 = scmp.lt.s32.totalorder %s22, 1
        %s288 = scalar_select %p287, %s22, 1
        %s289 = smul.addr %s288, 6
        %s290 = smul.addr %s289, 8
        %s291 = scalar_lea.vmem %s0, %s290
        %vm292 = vcmask 256000
        %293 = vst.msk [vmem:[#allocation2] sm:$0x7] %vm292, 0.0
        %294 = vst.msk [vmem:[#allocation2 + $0x10] sm:$0x7] %vm292, 0.0
        %295 = vst.msk [vmem:[#allocation2 + $0x20] sm:$0x7] %vm292, 0.0
        %296 = vst.msk [vmem:[#allocation2 + $0x30] sm:$0x7] %vm292, 0.0
        %297 = vst.msk [vmem:[#allocation2 + $0x40] sm:$0x7] %vm292, 0.0
        %298 = vst.msk [vmem:[#allocation2 + $0x50] sm:$0x7] %vm292, 0.0
        %299 = vst.msk [vmem:[#allocation2 + $0x60] sm:$0x7] %vm292, 0.0
        %300 = vst.msk [vmem:[#allocation2 + $0x70] sm:$0x7] %vm292, 0.0
        %vm301 = vcmask 253952
        %302 = vst.msk [vmem:[#allocation2 + $0x9] sm:$0x1] %vm301, 0.0
        %303 = vst.msk [vmem:[#allocation2 + $0x19] sm:$0x1] %vm301, 0.0
        %304 = vst.msk [vmem:[#allocation2 + $0x29] sm:$0x1] %vm301, 0.0
        %305 = vst.msk [vmem:[#allocation2 + $0x39] sm:$0x1] %vm301, 0.0
        %306 = vst.msk [vmem:[#allocation2 + $0x49] sm:$0x1] %vm301, 0.0
        %307 = vst.msk [vmem:[#allocation2 + $0x59] sm:$0x1] %vm301, 0.0
        %308 = vst.msk [vmem:[#allocation2 + $0x69] sm:$0x1] %vm301, 0.0
        %309 = vst.msk [vmem:[#allocation2 + $0x79] sm:$0x1] %vm301, 0.0
        %v310 = vld [vmem:[%s291] sm:$0xff]
        %v311 = vld [vmem:[%s291 + $0x8] sm:$0xff]
        %v312 = vld [vmem:[%s291 + $0x10] sm:$0xff]
        %v313 = vld [vmem:[%s291 + $0x18] sm:$0xff]
        %v314 = vld [vmem:[%s291 + $0x20] sm:$0xff]
        %v315 = vld [vmem:[%s291 + $0x28] sm:$0xff]
        %v316 = vld [vmem:[%s1] sm:$0xff]
        %v317 = vld [vmem:[%s1 + $0x8] sm:$0xff]
        %v318 = vld [vmem:[%s1 + $0x10] sm:$0xff]
        %v319 = vld [vmem:[%s1 + $0x18] sm:$0xff]
        %v320 = vld [vmem:[%s2] sm:$0x1]
        %v322 = vlaneseq
        %v323 = vshrl.u32 %v322, 7
        %v324 = vsub.s32 0, %v323
        %v325 = vrot.slane %v320, %v324
        %vm327 = vcmask 261120
        %v329 = vsel %vm327, %v310, 0
        %v332 = vsel %vm327, %v311, 0
        %v335 = vsel %vm327, %v312, 0
        %v338 = vsel %vm327, %v313, 0
        %v341 = vsel %vm327, %v314, 0
        %v344 = vsel %vm327, %v315, 0
        %346 = vmatprep.subr.mxu0 0.0
        %347 = vmatpush1.msra.mxu0 %v316
        %348 = vmatprep.subr.mxu0 0.0
        %349 = vmatpush1.msra.mxu0 %v317
        %350 = vmatprep.subr.mxu0 0.0
        %351 = vmatpush1.msra.mxu0 %v318
        %352 = vmatprep.subr.mxu0 0.0
        %353 = vmatpush1.msra.mxu0 %v319
        %354 = vmatprep.subr.mxu0 0.0
        %355 = vmatpush1.msra.mxu0 0.0
        %356 = vmatprep.subr.mxu0 0.0
        %357 = vmatpush1.msra.mxu0 0.0
        %358 = vmatprep.subr.mxu0 0.0
        %359 = vmatpush1.msra.mxu0 0.0
        %360 = vmatprep.subr.mxu0 0.0
        %361 = vmatpush1.msra.mxu0 0.0
        %362 = vmatprep.subr.mxu0 0.0
        %363 = vmatpush1.msra.mxu0 0.0
        %364 = vmatprep.subr.mxu0 0.0
        %365 = vmatpush1.msra.mxu0 0.0
        %366 = vmatprep.subr.mxu0 0.0
        %367 = vmatpush1.msra.mxu0 0.0
        %368 = vmatprep.subr.mxu0 0.0
        %369 = vmatpush1.msra.mxu0 0.0
        %370 = vmatprep.subr.mxu0 0.0
        %371 = vmatpush1.msra.mxu0 0.0
        %372 = vmatprep.subr.mxu0 0.0
        %373 = vmatpush1.msra.mxu0 0.0
        %374 = vmatprep.subr.mxu0 0.0
        %375 = vmatpush1.msra.mxu0 0.0
        %376 = vmatprep.subr.mxu0 0.0
        %377 = vmatpush1.msra.mxu0 0.0
        %378 = vmatprep.subr.mxu0 0.0
        %379 = vmatpush1.msra.mxu0 0.0
        %380 = vmatprep.subr.mxu0 0.0
        %381 = vmatpush1.msra.mxu0 0.0
        %382 = vmatprep.subr.mxu0 0.0
        %383 = vmatpush1.msra.mxu0 0.0
        %384 = vmatprep.subr.mxu0 0.0
        %385 = vmatpush1.msra.mxu0 0.0
        %386 = vmatprep.subr.mxu0 0.0
        %387 = vmatpush1.msra.mxu0 0.0
        %388 = vmatprep.subr.mxu0 0.0
        %389 = vmatpush1.msra.mxu0 0.0
        %390 = vmatprep.subr.mxu0 0.0
        %391 = vmatpush1.msra.mxu0 0.0
        %392 = vmatprep.subr.mxu0 0.0
        %393 = vmatpush1.msra.mxu0 0.0
        %394 = vmatprep.subr.mxu0 0.0
        %395 = vmatpush1.msra.mxu0 0.0
        %396 = vmatprep.subr.mxu0 0.0
        %397 = vmatpush1.msra.mxu0 0.0
        %398 = vmatprep.subr.mxu0 0.0
        %399 = vmatpush1.msra.mxu0 0.0
        %400 = vmatprep.subr.mxu0 0.0
        %401 = vmatpush1.msra.mxu0 0.0
        %402 = vmatprep.subr.mxu0 0.0
        %403 = vmatpush1.msra.mxu0 0.0
        %404 = vmatprep.subr.mxu0 0.0
        %405 = vmatpush1.msra.mxu0 0.0
        %406 = vmatprep.subr.mxu0 0.0
        %407 = vmatpush1.msra.mxu0 0.0
        %408 = vmatprep.subr.mxu0 0.0
        %409 = vmatpush1.msra.mxu0 0.0
        %410 = vmatprep.mubr.f32.mxu0 0.0
        %411 = vmatmul.mubr.f32.gmra.mrb[0].mxu0 %v329
        %v412 = vpop.f32.mrb[0].mxu0
        %v413 = vadd.f32 %v325, %v412
        %v414 = vpop.f32.mrb[0].mxu0
        %415 = vmatprep.mubr.f32.mxu0 0.0
        %416 = vmatmul.mubr.f32.gmra.mrb[0].mxu0 %v332
        %v417 = vpop.f32.mrb[0].mxu0
        %v418 = vadd.f32 %v325, %v417
        %v419 = vpop.f32.mrb[0].mxu0
        %420 = vmatprep.mubr.f32.mxu0 0.0
        %421 = vmatmul.mubr.f32.gmra.mrb[0].mxu0 %v335
        %v422 = vpop.f32.mrb[0].mxu0
        %v423 = vadd.f32 %v325, %v422
        %v424 = vpop.f32.mrb[0].mxu0
        %425 = vmatprep.mubr.f32.mxu0 0.0
        %426 = vmatmul.mubr.f32.gmra.mrb[0].mxu0 %v338
        %v427 = vpop.f32.mrb[0].mxu0
        %v428 = vadd.f32 %v325, %v427
        %v429 = vpop.f32.mrb[0].mxu0
        %430 = vmatprep.mubr.f32.mxu0 0.0
        %431 = vmatmul.mubr.f32.gmra.mrb[0].mxu0 %v341
        %v432 = vpop.f32.mrb[0].mxu0
        %v433 = vadd.f32 %v325, %v432
        %v434 = vpop.f32.mrb[0].mxu0
        %435 = vmatprep.mubr.f32.mxu0 0.0
        %436 = vmatmul.mubr.f32.gmra.mrb[0].mxu0 %v344
        %v437 = vpop.f32.mrb[0].mxu0
        %v438 = vadd.f32 %v325, %v437
        %v439 = vpop.f32.mrb[0].mxu0
        %440 = vdwg.mxu0
        %v447 = vcombine.high %v413, %v413
        %v449 = vunpack.c.l.s4 1983009808
        %v450 = vunpack.c.0.s8 %v449
        %v451 = vlaneseq
        %v452 = vshrl.u32 %v451, 7
        %v453 = vsub.s32 %v450, %v452
        %v454 = vrot.slane %v413, %v453
        %v456 = vunpack.c.l.s4 1983009808
        %v457 = vunpack.c.0.s8 %v456
        %v458 = vlaneseq
        %v459 = vshrl.u32 %v458, 7
        %v460 = vsub.s32 %v457, %v459
        %v461 = vrot.slane %v447, %v460
        %v462 = vcombine.high %v454, %v454
        %v463 = vcombine.high %v461, %v461
        %v464 = vcombine.high %v418, %v418
        %v466 = vunpack.c.l.s4 1983009808
        %v467 = vunpack.c.0.s8 %v466
        %v468 = vlaneseq
        %v469 = vshrl.u32 %v468, 7
        %v470 = vsub.s32 %v467, %v469
        %v471 = vrot.slane %v418, %v470
        %v473 = vunpack.c.l.s4 1983009808
        %v474 = vunpack.c.0.s8 %v473
        %v475 = vlaneseq
        %v476 = vshrl.u32 %v475, 7
        %v477 = vsub.s32 %v474, %v476
        %v478 = vrot.slane %v464, %v477
        %v479 = vcombine.high %v471, %v471
        %v480 = vcombine.high %v478, %v478
        %v481 = vcombine.high %v423, %v423
        %v483 = vunpack.c.l.s4 1983009808
        %v484 = vunpack.c.0.s8 %v483
        %v485 = vlaneseq
        %v486 = vshrl.u32 %v485, 7
        %v487 = vsub.s32 %v484, %v486
        %v488 = vrot.slane %v423, %v487
        %v490 = vunpack.c.l.s4 1983009808
        %v491 = vunpack.c.0.s8 %v490
        %v492 = vlaneseq
        %v493 = vshrl.u32 %v492, 7
        %v494 = vsub.s32 %v491, %v493
        %v495 = vrot.slane %v481, %v494
        %v496 = vcombine.high %v488, %v488
        %v497 = vcombine.high %v495, %v495
        %v498 = vcombine.high %v428, %v428
        %v500 = vunpack.c.l.s4 1983009808
        %v501 = vunpack.c.0.s8 %v500
        %v502 = vlaneseq
        %v503 = vshrl.u32 %v502, 7
        %v504 = vsub.s32 %v501, %v503
        %v505 = vrot.slane %v428, %v504
        %v507 = vunpack.c.l.s4 1983009808
        %v508 = vunpack.c.0.s8 %v507
        %v509 = vlaneseq
        %v510 = vshrl.u32 %v509, 7
        %v511 = vsub.s32 %v508, %v510
        %v512 = vrot.slane %v498, %v511
        %v513 = vcombine.high %v505, %v505
        %v514 = vcombine.high %v512, %v512
        %v515 = vcombine.high %v433, %v433
        %v517 = vunpack.c.l.s4 1983009808
        %v518 = vunpack.c.0.s8 %v517
        %v519 = vlaneseq
        %v520 = vshrl.u32 %v519, 7
        %v521 = vsub.s32 %v518, %v520
        %v522 = vrot.slane %v433, %v521
        %v524 = vunpack.c.l.s4 1983009808
        %v525 = vunpack.c.0.s8 %v524
        %v526 = vlaneseq
        %v527 = vshrl.u32 %v526, 7
        %v528 = vsub.s32 %v525, %v527
        %v529 = vrot.slane %v515, %v528
        %v530 = vcombine.high %v522, %v522
        %v531 = vcombine.high %v529, %v529
        %v532 = vcombine.high %v438, %v438
        %v534 = vunpack.c.l.s4 1983009808
        %v535 = vunpack.c.0.s8 %v534
        %v536 = vlaneseq
        %v537 = vshrl.u32 %v536, 7
        %v538 = vsub.s32 %v535, %v537
        %v539 = vrot.slane %v438, %v538
        %v541 = vunpack.c.l.s4 1983009808
        %v542 = vunpack.c.0.s8 %v541
        %v543 = vlaneseq
        %v544 = vshrl.u32 %v543, 7
        %v545 = vsub.s32 %v542, %v544
        %v546 = vrot.slane %v532, %v545
        %v547 = vcombine.high %v539, %v539
        %v548 = vcombine.high %v546, %v546
        %v549 = vcombine.low %v454, %v462
        %v551 = vunpack.c.l.s4 1983009808
        %v552 = vunpack.c.0.s8 %v551
        %v553 = vlaneseq
        %v554 = vshrl.u32 %v553, 7
        %v555 = vsub.s32 %v552, %v554
        %v556 = vrot.slane %v549, %v555
        %v558 = vunpack.c.l.s4 1983009808
        %v559 = vunpack.c.0.s8 %v558
        %v560 = vlaneseq
        %v561 = vshrl.u32 %v560, 7
        %v562 = vsub.s32 %v559, %v561
        %v563 = vrot.slane %v461, %v562
        %v564 = vcombine.low %v556, %v563
        %v565 = vcombine.low %v463, %v471
        %v567 = vunpack.c.l.s4 1983009808
        %v568 = vunpack.c.0.s8 %v567
        %v569 = vlaneseq
        %v570 = vshrl.u32 %v569, 7
        %v571 = vsub.s32 %v568, %v570
        %v572 = vrot.slane %v565, %v571
        %v574 = vunpack.c.l.s4 1983009808
        %v575 = vunpack.c.0.s8 %v574
        %v576 = vlaneseq
        %v577 = vshrl.u32 %v576, 7
        %v578 = vsub.s32 %v575, %v577
        %v579 = vrot.slane %v479, %v578
        %v580 = vcombine.low %v572, %v579
        %v581 = vcombine.low %v478, %v480
        %v583 = vunpack.c.l.s4 1983009808
        %v584 = vunpack.c.0.s8 %v583
        %v585 = vlaneseq
        %v586 = vshrl.u32 %v585, 7
        %v587 = vsub.s32 %v584, %v586
        %v588 = vrot.slane %v581, %v587
        %v590 = vunpack.c.l.s4 1983009808
        %v591 = vunpack.c.0.s8 %v590
        %v592 = vlaneseq
        %v593 = vshrl.u32 %v592, 7
        %v594 = vsub.s32 %v591, %v593
        %v595 = vrot.slane %v488, %v594
        %v596 = vcombine.low %v588, %v595
        %v597 = vcombine.low %v496, %v495
        %v599 = vunpack.c.l.s4 1983009808
        %v600 = vunpack.c.0.s8 %v599
        %v601 = vlaneseq
        %v602 = vshrl.u32 %v601, 7
        %v603 = vsub.s32 %v600, %v602
        %v604 = vrot.slane %v597, %v603
        %v606 = vunpack.c.l.s4 1983009808
        %v607 = vunpack.c.0.s8 %v606
        %v608 = vlaneseq
        %v609 = vshrl.u32 %v608, 7
        %v610 = vsub.s32 %v607, %v609
        %v611 = vrot.slane %v497, %v610
        %v612 = vcombine.low %v604, %v611
        %v613 = vcombine.low %v505, %v513
        %v615 = vunpack.c.l.s4 1983009808
        %v616 = vunpack.c.0.s8 %v615
        %v617 = vlaneseq
        %v618 = vshrl.u32 %v617, 7
        %v619 = vsub.s32 %v616, %v618
        %v620 = vrot.slane %v613, %v619
        %v622 = vunpack.c.l.s4 1983009808
        %v623 = vunpack.c.0.s8 %v622
        %v624 = vlaneseq
        %v625 = vshrl.u32 %v624, 7
        %v626 = vsub.s32 %v623, %v625
        %v627 = vrot.slane %v512, %v626
        %v628 = vcombine.low %v620, %v627
        %v629 = vcombine.low %v514, %v522
        %v631 = vunpack.c.l.s4 1983009808
        %v632 = vunpack.c.0.s8 %v631
        %v633 = vlaneseq
        %v634 = vshrl.u32 %v633, 7
        %v635 = vsub.s32 %v632, %v634
        %v636 = vrot.slane %v629, %v635
        %v638 = vunpack.c.l.s4 1983009808
        %v639 = vunpack.c.0.s8 %v638
        %v640 = vlaneseq
        %v641 = vshrl.u32 %v640, 7
        %v642 = vsub.s32 %v639, %v641
        %v643 = vrot.slane %v530, %v642
        %v644 = vcombine.low %v636, %v643
        %v645 = vcombine.low %v529, %v531
        %v647 = vunpack.c.l.s4 1983009808
        %v648 = vunpack.c.0.s8 %v647
        %v649 = vlaneseq
        %v650 = vshrl.u32 %v649, 7
        %v651 = vsub.s32 %v648, %v650
        %v652 = vrot.slane %v645, %v651
        %v654 = vunpack.c.l.s4 1983009808
        %v655 = vunpack.c.0.s8 %v654
        %v656 = vlaneseq
        %v657 = vshrl.u32 %v656, 7
        %v658 = vsub.s32 %v655, %v657
        %v659 = vrot.slane %v539, %v658
        %v660 = vcombine.low %v652, %v659
        %v661 = vcombine.low %v547, %v546
        %v663 = vunpack.c.l.s4 1983009808
        %v664 = vunpack.c.0.s8 %v663
        %v665 = vlaneseq
        %v666 = vshrl.u32 %v665, 7
        %v667 = vsub.s32 %v664, %v666
        %v668 = vrot.slane %v661, %v667
        %v670 = vunpack.c.l.s4 1983009808
        %v671 = vunpack.c.0.s8 %v670
        %v672 = vlaneseq
        %v673 = vshrl.u32 %v672, 7
        %v674 = vsub.s32 %v671, %v673
        %v675 = vrot.slane %v548, %v674
        %v676 = vcombine.low %v668, %v675
        %vm685 = vcmask 259072
        %686 = vst.msk [vmem:[#allocation2 + $0x3] sm:$0x3f] %vm685, %v564
        %687 = vst.msk [vmem:[#allocation2 + $0x13] sm:$0x3f] %vm685, %v580
        %688 = vst.msk [vmem:[#allocation2 + $0x23] sm:$0x3f] %vm685, %v596
        %689 = vst.msk [vmem:[#allocation2 + $0x33] sm:$0x3f] %vm685, %v612
        %690 = vst.msk [vmem:[#allocation2 + $0x43] sm:$0x3f] %vm685, %v628
        %691 = vst.msk [vmem:[#allocation2 + $0x53] sm:$0x3f] %vm685, %v644
        %692 = vst.msk [vmem:[#allocation2 + $0x63] sm:$0x3f] %vm685, %v660
        %693 = vst.msk [vmem:[#allocation2 + $0x73] sm:$0x3f] %vm685, %v676
        %v694 = vld [vmem:[%s4] sm:$0x1]
        %v695 = vld [vmem:[#allocation2] sm:$0xff]
        %v696 = vld [vmem:[#allocation2 + $0x10] sm:$0xff]
        %v697 = vld [vmem:[#allocation2 + $0x20] sm:$0xff]
        %v698 = vld [vmem:[#allocation2 + $0x30] sm:$0xff]
        %v699 = vld [vmem:[#allocation2 + $0x40] sm:$0xff]
        %v700 = vld [vmem:[#allocation2 + $0x50] sm:$0xff]
        %v701 = vld [vmem:[#allocation2 + $0x60] sm:$0xff]
        %v702 = vld [vmem:[#allocation2 + $0x70] sm:$0xff]
        %v703 = vld [vmem:[#allocation3] sm:$0xff]
        %v704 = vld [vmem:[#allocation3 + $0x8] sm:$0xff]
        %v705 = vld [vmem:[#allocation3 + $0x10] sm:$0xff]
        %v706 = vld [vmem:[#allocation3 + $0x18] sm:$0xff]
        %v708 = vsel %vm327, %v695, 0
        %v711 = vsel %vm327, %v696, 0
        %v714 = vsel %vm327, %v697, 0
        %v717 = vsel %vm327, %v698, 0
        %v720 = vsel %vm327, %v699, 0
        %v723 = vsel %vm327, %v700, 0
        %v726 = vsel %vm327, %v701, 0
        %v729 = vsel %vm327, %v702, 0
        %731 = vmatprep.subr.mxu0 0.0
        %732 = vmatpush1.msra.mxu0 %v703
        %733 = vmatprep.subr.mxu0 0.0
        %734 = vmatpush1.msra.mxu0 %v704
        %735 = vmatprep.subr.mxu0 0.0
        %736 = vmatpush1.msra.mxu0 %v705
        %737 = vmatprep.subr.mxu0 0.0
        %738 = vmatpush1.msra.mxu0 %v706
        %739 = vmatprep.subr.mxu0 0.0
        %740 = vmatpush1.msra.mxu0 0.0
        %741 = vmatprep.subr.mxu0 0.0
        %742 = vmatpush1.msra.mxu0 0.0
        %743 = vmatprep.subr.mxu0 0.0
        %744 = vmatpush1.msra.mxu0 0.0
        %745 = vmatprep.subr.mxu0 0.0
        %746 = vmatpush1.msra.mxu0 0.0
        %747 = vmatprep.subr.mxu0 0.0
        %748 = vmatpush1.msra.mxu0 0.0
        %749 = vmatprep.subr.mxu0 0.0
        %750 = vmatpush1.msra.mxu0 0.0
        %751 = vmatprep.subr.mxu0 0.0
        %752 = vmatpush1.msra.mxu0 0.0
        %753 = vmatprep.subr.mxu0 0.0
        %754 = vmatpush1.msra.mxu0 0.0
        %755 = vmatprep.subr.mxu0 0.0
        %756 = vmatpush1.msra.mxu0 0.0
        %757 = vmatprep.subr.mxu0 0.0
        %758 = vmatpush1.msra.mxu0 0.0
        %759 = vmatprep.subr.mxu0 0.0
        %760 = vmatpush1.msra.mxu0 0.0
        %761 = vmatprep.subr.mxu0 0.0
        %762 = vmatpush1.msra.mxu0 0.0
        %763 = vmatprep.subr.mxu0 0.0
        %764 = vmatpush1.msra.mxu0 0.0
        %765 = vmatprep.subr.mxu0 0.0
        %766 = vmatpush1.msra.mxu0 0.0
        %767 = vmatprep.subr.mxu0 0.0
        %768 = vmatpush1.msra.mxu0 0.0
        %769 = vmatprep.subr.mxu0 0.0
        %770 = vmatpush1.msra.mxu0 0.0
        %771 = vmatprep.subr.mxu0 0.0
        %772 = vmatpush1.msra.mxu0 0.0
        %773 = vmatprep.subr.mxu0 0.0
        %774 = vmatpush1.msra.mxu0 0.0
        %775 = vmatprep.subr.mxu0 0.0
        %776 = vmatpush1.msra.mxu0 0.0
        %777 = vmatprep.subr.mxu0 0.0
        %778 = vmatpush1.msra.mxu0 0.0
        %779 = vmatprep.subr.mxu0 0.0
        %780 = vmatpush1.msra.mxu0 0.0
        %781 = vmatprep.subr.mxu0 0.0
        %782 = vmatpush1.msra.mxu0 0.0
        %783 = vmatprep.subr.mxu0 0.0
        %784 = vmatpush1.msra.mxu0 0.0
        %785 = vmatprep.subr.mxu0 0.0
        %786 = vmatpush1.msra.mxu0 0.0
        %787 = vmatprep.subr.mxu0 0.0
        %788 = vmatpush1.msra.mxu0 0.0
        %789 = vmatprep.subr.mxu0 0.0
        %790 = vmatpush1.msra.mxu0 0.0
        %791 = vmatprep.subr.mxu0 0.0
        %792 = vmatpush1.msra.mxu0 0.0
        %793 = vmatprep.subr.mxu0 0.0
        %794 = vmatpush1.msra.mxu0 0.0
        %795 = vmatprep.mubr.f32.mxu0 0.0
        %796 = vmatmul.mubr.f32.gmra.mrb[0].mxu0 %v708
        %v797 = vpop.f32.mrb[0].mxu0
        %v798 = vadd.f32 0.0, %v797
        %v799 = vpop.f32.mrb[0].mxu0
        %800 = vmatprep.mubr.f32.mxu0 0.0
        %801 = vmatmul.mubr.f32.gmra.mrb[0].mxu0 %v711
        %v802 = vpop.f32.mrb[0].mxu0
        %v803 = vadd.f32 0.0, %v802
        %v804 = vpop.f32.mrb[0].mxu0
        %805 = vmatprep.mubr.f32.mxu0 0.0
        %806 = vmatmul.mubr.f32.gmra.mrb[0].mxu0 %v714
        %v807 = vpop.f32.mrb[0].mxu0
        %v808 = vadd.f32 0.0, %v807
        %v809 = vpop.f32.mrb[0].mxu0
        %810 = vmatprep.mubr.f32.mxu0 0.0
        %811 = vmatmul.mubr.f32.gmra.mrb[0].mxu0 %v717
        %v812 = vpop.f32.mrb[0].mxu0
        %v813 = vadd.f32 0.0, %v812
        %v814 = vpop.f32.mrb[0].mxu0
        %815 = vmatprep.mubr.f32.mxu0 0.0
        %816 = vmatmul.mubr.f32.gmra.mrb[0].mxu0 %v720
        %v817 = vpop.f32.mrb[0].mxu0
        %v818 = vadd.f32 0.0, %v817
        %v819 = vpop.f32.mrb[0].mxu0
        %820 = vmatprep.mubr.f32.mxu0 0.0
        %821 = vmatmul.mubr.f32.gmra.mrb[0].mxu0 %v723
        %v822 = vpop.f32.mrb[0].mxu0
        %v823 = vadd.f32 0.0, %v822
        %v824 = vpop.f32.mrb[0].mxu0
        %825 = vmatprep.mubr.f32.mxu0 0.0
        %826 = vmatmul.mubr.f32.gmra.mrb[0].mxu0 %v726
        %v827 = vpop.f32.mrb[0].mxu0
        %v828 = vadd.f32 0.0, %v827
        %v829 = vpop.f32.mrb[0].mxu0
        %830 = vmatprep.mubr.f32.mxu0 0.0
        %831 = vmatmul.mubr.f32.gmra.mrb[0].mxu0 %v729
        %v832 = vpop.f32.mrb[0].mxu0
        %v833 = vadd.f32 0.0, %v832
        %v834 = vpop.f32.mrb[0].mxu0
        %835 = vdwg.mxu0
        %v837 = vlaneseq
        %v838 = vshrl.u32 %v837, 7
        %v839 = vsub.s32 0, %v838
        %v840 = vrot.slane %v694, %v839
        %v842 = vadd.f32 %v840, %v798
        %v843 = vadd.f32 %v840, %v803
        %v844 = vadd.f32 %v840, %v808
        %v845 = vadd.f32 %v840, %v813
        %v846 = vadd.f32 %v840, %v818
        %v847 = vadd.f32 %v840, %v823
        %v848 = vadd.f32 %v840, %v828
        %v849 = vadd.f32 %v840, %v833
        %v850 = vld [vmem:[#allocation2 + $0x1] sm:$0xff]
        %v851 = vld [vmem:[#allocation2 + $0x11] sm:$0xff]
        %v852 = vld [vmem:[#allocation2 + $0x21] sm:$0xff]
        %v853 = vld [vmem:[#allocation2 + $0x31] sm:$0xff]
        %v854 = vld [vmem:[#allocation2 + $0x41] sm:$0xff]
        %v855 = vld [vmem:[#allocation2 + $0x51] sm:$0xff]
        %v856 = vld [vmem:[#allocation2 + $0x61] sm:$0xff]
        %v857 = vld [vmem:[#allocation2 + $0x71] sm:$0xff]
        %s858 = scalar_lea.vmem [#allocation3], 32
        %v859 = vld [vmem:[%s858] sm:$0xff]
        %v860 = vld [vmem:[%s858 + $0x8] sm:$0xff]
        %v861 = vld [vmem:[%s858 + $0x10] sm:$0xff]
        %v862 = vld [vmem:[%s858 + $0x18] sm:$0xff]
        %v864 = vsel %vm327, %v850, 0
        %v867 = vsel %vm327, %v851, 0
        %v870 = vsel %vm327, %v852, 0
        %v873 = vsel %vm327, %v853, 0
        %v876 = vsel %vm327, %v854, 0
        %v879 = vsel %vm327, %v855, 0
        %v882 = vsel %vm327, %v856, 0
        %v885 = vsel %vm327, %v857, 0
        %887 = vmatprep.subr.mxu0 0.0
        %888 = vmatpush1.msra.mxu0 %v859
        %889 = vmatprep.subr.mxu0 0.0
        %890 = vmatpush1.msra.mxu0 %v860
        %891 = vmatprep.subr.mxu0 0.0
        %892 = vmatpush1.msra.mxu0 %v861
        %893 = vmatprep.subr.mxu0 0.0
        %894 = vmatpush1.msra.mxu0 %v862
        %895 = vmatprep.subr.mxu0 0.0
        %896 = vmatpush1.msra.mxu0 0.0
        %897 = vmatprep.subr.mxu0 0.0
        %898 = vmatpush1.msra.mxu0 0.0
        %899 = vmatprep.subr.mxu0 0.0
        %900 = vmatpush1.msra.mxu0 0.0
        %901 = vmatprep.subr.mxu0 0.0
        %902 = vmatpush1.msra.mxu0 0.0
        %903 = vmatprep.subr.mxu0 0.0
        %904 = vmatpush1.msra.mxu0 0.0
        %905 = vmatprep.subr.mxu0 0.0
        %906 = vmatpush1.msra.mxu0 0.0
        %907 = vmatprep.subr.mxu0 0.0
        %908 = vmatpush1.msra.mxu0 0.0
        %909 = vmatprep.subr.mxu0 0.0
        %910 = vmatpush1.msra.mxu0 0.0
        %911 = vmatprep.subr.mxu0 0.0
        %912 = vmatpush1.msra.mxu0 0.0
        %913 = vmatprep.subr.mxu0 0.0
        %914 = vmatpush1.msra.mxu0 0.0
        %915 = vmatprep.subr.mxu0 0.0
        %916 = vmatpush1.msra.mxu0 0.0
        %917 = vmatprep.subr.mxu0 0.0
        %918 = vmatpush1.msra.mxu0 0.0
        %919 = vmatprep.subr.mxu0 0.0
        %920 = vmatpush1.msra.mxu0 0.0
        %921 = vmatprep.subr.mxu0 0.0
        %922 = vmatpush1.msra.mxu0 0.0
        %923 = vmatprep.subr.mxu0 0.0
        %924 = vmatpush1.msra.mxu0 0.0
        %925 = vmatprep.subr.mxu0 0.0
        %926 = vmatpush1.msra.mxu0 0.0
        %927 = vmatprep.subr.mxu0 0.0
        %928 = vmatpush1.msra.mxu0 0.0
        %929 = vmatprep.subr.mxu0 0.0
        %930 = vmatpush1.msra.mxu0 0.0
        %931 = vmatprep.subr.mxu0 0.0
        %932 = vmatpush1.msra.mxu0 0.0
        %933 = vmatprep.subr.mxu0 0.0
        %934 = vmatpush1.msra.mxu0 0.0
        %935 = vmatprep.subr.mxu0 0.0
        %936 = vmatpush1.msra.mxu0 0.0
        %937 = vmatprep.subr.mxu0 0.0
        %938 = vmatpush1.msra.mxu0 0.0
        %939 = vmatprep.subr.mxu0 0.0
        %940 = vmatpush1.msra.mxu0 0.0
        %941 = vmatprep.subr.mxu0 0.0
        %942 = vmatpush1.msra.mxu0 0.0
        %943 = vmatprep.subr.mxu0 0.0
        %944 = vmatpush1.msra.mxu0 0.0
        %945 = vmatprep.subr.mxu0 0.0
        %946 = vmatpush1.msra.mxu0 0.0
        %947 = vmatprep.subr.mxu0 0.0
        %948 = vmatpush1.msra.mxu0 0.0
        %949 = vmatprep.subr.mxu0 0.0
        %950 = vmatpush1.msra.mxu0 0.0
        %951 = vmatprep.mubr.f32.mxu0 0.0
        %952 = vmatmul.mubr.f32.gmra.mrb[0].mxu0 %v864
        %v953 = vpop.f32.mrb[0].mxu0
        %v954 = vadd.f32 0.0, %v953
        %v955 = vpop.f32.mrb[0].mxu0
        %956 = vmatprep.mubr.f32.mxu0 0.0
        %957 = vmatmul.mubr.f32.gmra.mrb[0].mxu0 %v867
        %v958 = vpop.f32.mrb[0].mxu0
        %v959 = vadd.f32 0.0, %v958
        %v960 = vpop.f32.mrb[0].mxu0
        %961 = vmatprep.mubr.f32.mxu0 0.0
        %962 = vmatmul.mubr.f32.gmra.mrb[0].mxu0 %v870
        %v963 = vpop.f32.mrb[0].mxu0
        %v964 = vadd.f32 0.0, %v963
        %v965 = vpop.f32.mrb[0].mxu0
        %966 = vmatprep.mubr.f32.mxu0 0.0
        %967 = vmatmul.mubr.f32.gmra.mrb[0].mxu0 %v873
        %v968 = vpop.f32.mrb[0].mxu0
        %v969 = vadd.f32 0.0, %v968
        %v970 = vpop.f32.mrb[0].mxu0
        %971 = vmatprep.mubr.f32.mxu0 0.0
        %972 = vmatmul.mubr.f32.gmra.mrb[0].mxu0 %v876
        %v973 = vpop.f32.mrb[0].mxu0
        %v974 = vadd.f32 0.0, %v973
        %v975 = vpop.f32.mrb[0].mxu0
        %976 = vmatprep.mubr.f32.mxu0 0.0
        %977 = vmatmul.mubr.f32.gmra.mrb[0].mxu0 %v879
        %v978 = vpop.f32.mrb[0].mxu0
        %v979 = vadd.f32 0.0, %v978
        %v980 = vpop.f32.mrb[0].mxu0
        %981 = vmatprep.mubr.f32.mxu0 0.0
        %982 = vmatmul.mubr.f32.gmra.mrb[0].mxu0 %v882
        %v983 = vpop.f32.mrb[0].mxu0
        %v984 = vadd.f32 0.0, %v983
        %v985 = vpop.f32.mrb[0].mxu0
        %986 = vmatprep.mubr.f32.mxu0 0.0
        %987 = vmatmul.mubr.f32.gmra.mrb[0].mxu0 %v885
        %v988 = vpop.f32.mrb[0].mxu0
        %v989 = vadd.f32 0.0, %v988
        %v990 = vpop.f32.mrb[0].mxu0
        %991 = vdwg.mxu0
        %v992 = vadd.f32 %v842, %v954
        %v993 = vadd.f32 %v843, %v959
        %v994 = vadd.f32 %v844, %v964
        %v995 = vadd.f32 %v845, %v969
        %v996 = vadd.f32 %v846, %v974
        %v997 = vadd.f32 %v847, %v979
        %v998 = vadd.f32 %v848, %v984
        %v999 = vadd.f32 %v849, %v989
        %v1000 = vld [vmem:[#allocation2 + $0x2] sm:$0xff]
        %v1001 = vld [vmem:[#allocation2 + $0x12] sm:$0xff]
        %v1002 = vld [vmem:[#allocation2 + $0x22] sm:$0xff]
        %v1003 = vld [vmem:[#allocation2 + $0x32] sm:$0xff]
        %v1004 = vld [vmem:[#allocation2 + $0x42] sm:$0xff]
        %v1005 = vld [vmem:[#allocation2 + $0x52] sm:$0xff]
        %v1006 = vld [vmem:[#allocation2 + $0x62] sm:$0xff]
        %v1007 = vld [vmem:[#allocation2 + $0x72] sm:$0xff]
        %s1008 = scalar_lea.vmem [#allocation3], 64
        %v1009 = vld [vmem:[%s1008] sm:$0xff]
        %v1010 = vld [vmem:[%s1008 + $0x8] sm:$0xff]
        %v1011 = vld [vmem:[%s1008 + $0x10] sm:$0xff]
        %v1012 = vld [vmem:[%s1008 + $0x18] sm:$0xff]
        %v1014 = vsel %vm327, %v1000, 0
        %v1017 = vsel %vm327, %v1001, 0
        %v1020 = vsel %vm327, %v1002, 0
        %v1023 = vsel %vm327, %v1003, 0
        %v1026 = vsel %vm327, %v1004, 0
        %v1029 = vsel %vm327, %v1005, 0
        %v1032 = vsel %vm327, %v1006, 0
        %v1035 = vsel %vm327, %v1007, 0
        %1037 = vmatprep.subr.mxu0 0.0
        %1038 = vmatpush1.msra.mxu0 %v1009
        %1039 = vmatprep.subr.mxu0 0.0
        %1040 = vmatpush1.msra.mxu0 %v1010
        %1041 = vmatprep.subr.mxu0 0.0
        %1042 = vmatpush1.msra.mxu0 %v1011
        %1043 = vmatprep.subr.mxu0 0.0
        %1044 = vmatpush1.msra.mxu0 %v1012
        %1045 = vmatprep.subr.mxu0 0.0
        %1046 = vmatpush1.msra.mxu0 0.0
        %1047 = vmatprep.subr.mxu0 0.0
        %1048 = vmatpush1.msra.mxu0 0.0
        %1049 = vmatprep.subr.mxu0 0.0
        %1050 = vmatpush1.msra.mxu0 0.0
        %1051 = vmatprep.subr.mxu0 0.0
        %1052 = vmatpush1.msra.mxu0 0.0
        %1053 = vmatprep.subr.mxu0 0.0
        %1054 = vmatpush1.msra.mxu0 0.0
        %1055 = vmatprep.subr.mxu0 0.0
        %1056 = vmatpush1.msra.mxu0 0.0
        %1057 = vmatprep.subr.mxu0 0.0
        %1058 = vmatpush1.msra.mxu0 0.0
        %1059 = vmatprep.subr.mxu0 0.0
        %1060 = vmatpush1.msra.mxu0 0.0
        %1061 = vmatprep.subr.mxu0 0.0
        %1062 = vmatpush1.msra.mxu0 0.0
        %1063 = vmatprep.subr.mxu0 0.0
        %1064 = vmatpush1.msra.mxu0 0.0
        %1065 = vmatprep.subr.mxu0 0.0
        %1066 = vmatpush1.msra.mxu0 0.0
        %1067 = vmatprep.subr.mxu0 0.0
        %1068 = vmatpush1.msra.mxu0 0.0
        %1069 = vmatprep.subr.mxu0 0.0
        %1070 = vmatpush1.msra.mxu0 0.0
        %1071 = vmatprep.subr.mxu0 0.0
        %1072 = vmatpush1.msra.mxu0 0.0
        %1073 = vmatprep.subr.mxu0 0.0
        %1074 = vmatpush1.msra.mxu0 0.0
        %1075 = vmatprep.subr.mxu0 0.0
        %1076 = vmatpush1.msra.mxu0 0.0
        %1077 = vmatprep.subr.mxu0 0.0
        %1078 = vmatpush1.msra.mxu0 0.0
        %1079 = vmatprep.subr.mxu0 0.0
        %1080 = vmatpush1.msra.mxu0 0.0
        %1081 = vmatprep.subr.mxu0 0.0
        %1082 = vmatpush1.msra.mxu0 0.0
        %1083 = vmatprep.subr.mxu0 0.0
        %1084 = vmatpush1.msra.mxu0 0.0
        %1085 = vmatprep.subr.mxu0 0.0
        %1086 = vmatpush1.msra.mxu0 0.0
        %1087 = vmatprep.subr.mxu0 0.0
        %1088 = vmatpush1.msra.mxu0 0.0
        %1089 = vmatprep.subr.mxu0 0.0
        %1090 = vmatpush1.msra.mxu0 0.0
        %1091 = vmatprep.subr.mxu0 0.0
        %1092 = vmatpush1.msra.mxu0 0.0
        %1093 = vmatprep.subr.mxu0 0.0
        %1094 = vmatpush1.msra.mxu0 0.0
        %1095 = vmatprep.subr.mxu0 0.0
        %1096 = vmatpush1.msra.mxu0 0.0
        %1097 = vmatprep.subr.mxu0 0.0
        %1098 = vmatpush1.msra.mxu0 0.0
        %1099 = vmatprep.subr.mxu0 0.0
        %1100 = vmatpush1.msra.mxu0 0.0
        %1101 = vmatprep.mubr.f32.mxu0 0.0
        %1102 = vmatmul.mubr.f32.gmra.mrb[0].mxu0 %v1014
        %v1103 = vpop.f32.mrb[0].mxu0
        %v1104 = vadd.f32 0.0, %v1103
        %v1105 = vpop.f32.mrb[0].mxu0
        %1106 = vmatprep.mubr.f32.mxu0 0.0
        %1107 = vmatmul.mubr.f32.gmra.mrb[0].mxu0 %v1017
        %v1108 = vpop.f32.mrb[0].mxu0
        %v1109 = vadd.f32 0.0, %v1108
        %v1110 = vpop.f32.mrb[0].mxu0
        %1111 = vmatprep.mubr.f32.mxu0 0.0
        %1112 = vmatmul.mubr.f32.gmra.mrb[0].mxu0 %v1020
        %v1113 = vpop.f32.mrb[0].mxu0
        %v1114 = vadd.f32 0.0, %v1113
        %v1115 = vpop.f32.mrb[0].mxu0
        %1116 = vmatprep.mubr.f32.mxu0 0.0
        %1117 = vmatmul.mubr.f32.gmra.mrb[0].mxu0 %v1023
        %v1118 = vpop.f32.mrb[0].mxu0
        %v1119 = vadd.f32 0.0, %v1118
        %v1120 = vpop.f32.mrb[0].mxu0
        %1121 = vmatprep.mubr.f32.mxu0 0.0
        %1122 = vmatmul.mubr.f32.gmra.mrb[0].mxu0 %v1026
        %v1123 = vpop.f32.mrb[0].mxu0
        %v1124 = vadd.f32 0.0, %v1123
        %v1125 = vpop.f32.mrb[0].mxu0
        %1126 = vmatprep.mubr.f32.mxu0 0.0
        %1127 = vmatmul.mubr.f32.gmra.mrb[0].mxu0 %v1029
        %v1128 = vpop.f32.mrb[0].mxu0
        %v1129 = vadd.f32 0.0, %v1128
        %v1130 = vpop.f32.mrb[0].mxu0
        %1131 = vmatprep.mubr.f32.mxu0 0.0
        %1132 = vmatmul.mubr.f32.gmra.mrb[0].mxu0 %v1032
        %v1133 = vpop.f32.mrb[0].mxu0
        %v1134 = vadd.f32 0.0, %v1133
        %v1135 = vpop.f32.mrb[0].mxu0
        %1136 = vmatprep.mubr.f32.mxu0 0.0
        %1137 = vmatmul.mubr.f32.gmra.mrb[0].mxu0 %v1035
        %v1138 = vpop.f32.mrb[0].mxu0
        %v1139 = vadd.f32 0.0, %v1138
        %v1140 = vpop.f32.mrb[0].mxu0
        %1141 = vdwg.mxu0
        %v1142 = vadd.f32 %v992, %v1104
        %v1143 = vadd.f32 %v993, %v1109
        %v1144 = vadd.f32 %v994, %v1114
        %v1145 = vadd.f32 %v995, %v1119
        %v1146 = vadd.f32 %v996, %v1124
        %v1147 = vadd.f32 %v997, %v1129
        %v1148 = vadd.f32 %v998, %v1134
        %v1149 = vadd.f32 %v999, %v1139
        %v1150 = vmax.f32 %v1142, 0.0
        %v1151 = vmax.f32 %v1143, 0.0
        %v1152 = vmax.f32 %v1144, 0.0
        %v1153 = vmax.f32 %v1145, 0.0
        %v1154 = vmax.f32 %v1146, 0.0
        %v1155 = vmax.f32 %v1147, 0.0
        %v1156 = vmax.f32 %v1148, 0.0
        %v1157 = vmax.f32 %v1149, 0.0
        %1158 = vst.msk [vmem:[#allocation2 + $0x1] sm:$0xff] %vm327, %v1150
        %1159 = vst.msk [vmem:[#allocation2 + $0x11] sm:$0xff] %vm327, %v1151
        %1160 = vst.msk [vmem:[#allocation2 + $0x21] sm:$0xff] %vm327, %v1152
        %1161 = vst.msk [vmem:[#allocation2 + $0x31] sm:$0xff] %vm327, %v1153
        %1162 = vst.msk [vmem:[#allocation2 + $0x41] sm:$0xff] %vm327, %v1154
        %1163 = vst.msk [vmem:[#allocation2 + $0x51] sm:$0xff] %vm327, %v1155
        %1164 = vst.msk [vmem:[#allocation2 + $0x61] sm:$0xff] %vm327, %v1156
        %1165 = vst.msk [vmem:[#allocation2 + $0x71] sm:$0xff] %vm327, %v1157
        %s1166 = scalar_lea.vmem %s4, 1
        %v1167 = vld [vmem:[%s1166] sm:$0x1]
        %v1168 = vld [vmem:[#allocation2] sm:$0xff]
        %v1169 = vld [vmem:[#allocation2 + $0x10] sm:$0xff]
        %v1170 = vld [vmem:[#allocation2 + $0x20] sm:$0xff]
        %v1171 = vld [vmem:[#allocation2 + $0x30] sm:$0xff]
        %v1172 = vld [vmem:[#allocation2 + $0x40] sm:$0xff]
        %v1173 = vld [vmem:[#allocation2 + $0x50] sm:$0xff]
        %v1174 = vld [vmem:[#allocation2 + $0x60] sm:$0xff]
        %v1175 = vld [vmem:[#allocation2 + $0x70] sm:$0xff]
        %s1176 = scalar_lea.vmem [#allocation3], 96
        %v1177 = vld [vmem:[%s1176] sm:$0xff]
        %v1178 = vld [vmem:[%s1176 + $0x8] sm:$0xff]
        %v1179 = vld [vmem:[%s1176 + $0x10] sm:$0xff]
        %v1180 = vld [vmem:[%s1176 + $0x18] sm:$0xff]
        %v1182 = vsel %vm327, %v1168, 0
        %v1185 = vsel %vm327, %v1169, 0
        %v1188 = vsel %vm327, %v1170, 0
        %v1191 = vsel %vm327, %v1171, 0
        %v1194 = vsel %vm327, %v1172, 0
        %v1197 = vsel %vm327, %v1173, 0
        %v1200 = vsel %vm327, %v1174, 0
        %v1203 = vsel %vm327, %v1175, 0
        %1205 = vmatprep.subr.mxu0 0.0
        %1206 = vmatpush1.msra.mxu0 %v1177
        %1207 = vmatprep.subr.mxu0 0.0
        %1208 = vmatpush1.msra.mxu0 %v1178
        %1209 = vmatprep.subr.mxu0 0.0
        %1210 = vmatpush1.msra.mxu0 %v1179
        %1211 = vmatprep.subr.mxu0 0.0
        %1212 = vmatpush1.msra.mxu0 %v1180
        %1213 = vmatprep.subr.mxu0 0.0
        %1214 = vmatpush1.msra.mxu0 0.0
        %1215 = vmatprep.subr.mxu0 0.0
        %1216 = vmatpush1.msra.mxu0 0.0
        %1217 = vmatprep.subr.mxu0 0.0
        %1218 = vmatpush1.msra.mxu0 0.0
        %1219 = vmatprep.subr.mxu0 0.0
        %1220 = vmatpush1.msra.mxu0 0.0
        %1221 = vmatprep.subr.mxu0 0.0
        %1222 = vmatpush1.msra.mxu0 0.0
        %1223 = vmatprep.subr.mxu0 0.0
        %1224 = vmatpush1.msra.mxu0 0.0
        %1225 = vmatprep.subr.mxu0 0.0
        %1226 = vmatpush1.msra.mxu0 0.0
        %1227 = vmatprep.subr.mxu0 0.0
        %1228 = vmatpush1.msra.mxu0 0.0
        %1229 = vmatprep.subr.mxu0 0.0
        %1230 = vmatpush1.msra.mxu0 0.0
        %1231 = vmatprep.subr.mxu0 0.0
        %1232 = vmatpush1.msra.mxu0 0.0
        %1233 = vmatprep.subr.mxu0 0.0
        %1234 = vmatpush1.msra.mxu0 0.0
        %1235 = vmatprep.subr.mxu0 0.0
        %1236 = vmatpush1.msra.mxu0 0.0
        %1237 = vmatprep.subr.mxu0 0.0
        %1238 = vmatpush1.msra.mxu0 0.0
        %1239 = vmatprep.subr.mxu0 0.0
        %1240 = vmatpush1.msra.mxu0 0.0
        %1241 = vmatprep.subr.mxu0 0.0
        %1242 = vmatpush1.msra.mxu0 0.0
        %1243 = vmatprep.subr.mxu0 0.0
        %1244 = vmatpush1.msra.mxu0 0.0
        %1245 = vmatprep.subr.mxu0 0.0
        %1246 = vmatpush1.msra.mxu0 0.0
        %1247 = vmatprep.subr.mxu0 0.0
        %1248 = vmatpush1.msra.mxu0 0.0
        %1249 = vmatprep.subr.mxu0 0.0
        %1250 = vmatpush1.msra.mxu0 0.0
        %1251 = vmatprep.subr.mxu0 0.0
        %1252 = vmatpush1.msra.mxu0 0.0
        %1253 = vmatprep.subr.mxu0 0.0
        %1254 = vmatpush1.msra.mxu0 0.0
        %1255 = vmatprep.subr.mxu0 0.0
        %1256 = vmatpush1.msra.mxu0 0.0
        %1257 = vmatprep.subr.mxu0 0.0
        %1258 = vmatpush1.msra.mxu0 0.0
        %1259 = vmatprep.subr.mxu0 0.0
        %1260 = vmatpush1.msra.mxu0 0.0
        %1261 = vmatprep.subr.mxu0 0.0
        %1262 = vmatpush1.msra.mxu0 0.0
        %1263 = vmatprep.subr.mxu0 0.0
        %1264 = vmatpush1.msra.mxu0 0.0
        %1265 = vmatprep.subr.mxu0 0.0
        %1266 = vmatpush1.msra.mxu0 0.0
        %1267 = vmatprep.subr.mxu0 0.0
        %1268 = vmatpush1.msra.mxu0 0.0
        %1269 = vmatprep.mubr.f32.mxu0 0.0
        %1270 = vmatmul.mubr.f32.gmra.mrb[0].mxu0 %v1182
        %v1271 = vpop.f32.mrb[0].mxu0
        %v1272 = vadd.f32 0.0, %v1271
        %v1273 = vpop.f32.mrb[0].mxu0
        %1274 = vmatprep.mubr.f32.mxu0 0.0
        %1275 = vmatmul.mubr.f32.gmra.mrb[0].mxu0 %v1185
        %v1276 = vpop.f32.mrb[0].mxu0
        %v1277 = vadd.f32 0.0, %v1276
        %v1278 = vpop.f32.mrb[0].mxu0
        %1279 = vmatprep.mubr.f32.mxu0 0.0
        %1280 = vmatmul.mubr.f32.gmra.mrb[0].mxu0 %v1188
        %v1281 = vpop.f32.mrb[0].mxu0
        %v1282 = vadd.f32 0.0, %v1281
        %v1283 = vpop.f32.mrb[0].mxu0
        %1284 = vmatprep.mubr.f32.mxu0 0.0
        %1285 = vmatmul.mubr.f32.gmra.mrb[0].mxu0 %v1191
        %v1286 = vpop.f32.mrb[0].mxu0
        %v1287 = vadd.f32 0.0, %v1286
        %v1288 = vpop.f32.mrb[0].mxu0
        %1289 = vmatprep.mubr.f32.mxu0 0.0
        %1290 = vmatmul.mubr.f32.gmra.mrb[0].mxu0 %v1194
        %v1291 = vpop.f32.mrb[0].mxu0
        %v1292 = vadd.f32 0.0, %v1291
        %v1293 = vpop.f32.mrb[0].mxu0
        %1294 = vmatprep.mubr.f32.mxu0 0.0
        %1295 = vmatmul.mubr.f32.gmra.mrb[0].mxu0 %v1197
        %v1296 = vpop.f32.mrb[0].mxu0
        %v1297 = vadd.f32 0.0, %v1296
        %v1298 = vpop.f32.mrb[0].mxu0
        %1299 = vmatprep.mubr.f32.mxu0 0.0
        %1300 = vmatmul.mubr.f32.gmra.mrb[0].mxu0 %v1200
        %v1301 = vpop.f32.mrb[0].mxu0
        %v1302 = vadd.f32 0.0, %v1301
        %v1303 = vpop.f32.mrb[0].mxu0
        %1304 = vmatprep.mubr.f32.mxu0 0.0
        %1305 = vmatmul.mubr.f32.gmra.mrb[0].mxu0 %v1203
        %v1306 = vpop.f32.mrb[0].mxu0
        %v1307 = vadd.f32 0.0, %v1306
        %v1308 = vpop.f32.mrb[0].mxu0
        %1309 = vdwg.mxu0
        %v1311 = vlaneseq
        %v1312 = vshrl.u32 %v1311, 7
        %v1313 = vsub.s32 0, %v1312
        %v1314 = vrot.slane %v1167, %v1313
        %v1316 = vadd.f32 %v1314, %v1272
        %v1317 = vadd.f32 %v1314, %v1277
        %v1318 = vadd.f32 %v1314, %v1282
        %v1319 = vadd.f32 %v1314, %v1287
        %v1320 = vadd.f32 %v1314, %v1292
        %v1321 = vadd.f32 %v1314, %v1297
        %v1322 = vadd.f32 %v1314, %v1302
        %v1323 = vadd.f32 %v1314, %v1307
        %v1324 = vld [vmem:[#allocation2 + $0x1] sm:$0xff]
        %v1325 = vld [vmem:[#allocation2 + $0x11] sm:$0xff]
        %v1326 = vld [vmem:[#allocation2 + $0x21] sm:$0xff]
        %v1327 = vld [vmem:[#allocation2 + $0x31] sm:$0xff]
        %v1328 = vld [vmem:[#allocation2 + $0x41] sm:$0xff]
        %v1329 = vld [vmem:[#allocation2 + $0x51] sm:$0xff]
        %v1330 = vld [vmem:[#allocation2 + $0x61] sm:$0xff]
        %v1331 = vld [vmem:[#allocation2 + $0x71] sm:$0xff]
        %s1332 = scalar_lea.vmem [#allocation3], 128
        %v1333 = vld [vmem:[%s1332] sm:$0xff]
        %v1334 = vld [vmem:[%s1332 + $0x8] sm:$0xff]
        %v1335 = vld [vmem:[%s1332 + $0x10] sm:$0xff]
        %v1336 = vld [vmem:[%s1332 + $0x18] sm:$0xff]
        %v1338 = vsel %vm327, %v1324, 0
        %v1341 = vsel %vm327, %v1325, 0
        %v1344 = vsel %vm327, %v1326, 0
        %v1347 = vsel %vm327, %v1327, 0
        %v1350 = vsel %vm327, %v1328, 0
        %v1353 = vsel %vm327, %v1329, 0
        %v1356 = vsel %vm327, %v1330, 0
        %v1359 = vsel %vm327, %v1331, 0
        %1361 = vmatprep.subr.mxu0 0.0
        %1362 = vmatpush1.msra.mxu0 %v1333
        %1363 = vmatprep.subr.mxu0 0.0
        %1364 = vmatpush1.msra.mxu0 %v1334
        %1365 = vmatprep.subr.mxu0 0.0
        %1366 = vmatpush1.msra.mxu0 %v1335
        %1367 = vmatprep.subr.mxu0 0.0
        %1368 = vmatpush1.msra.mxu0 %v1336
        %1369 = vmatprep.subr.mxu0 0.0
        %1370 = vmatpush1.msra.mxu0 0.0
        %1371 = vmatprep.subr.mxu0 0.0
        %1372 = vmatpush1.msra.mxu0 0.0
        %1373 = vmatprep.subr.mxu0 0.0
        %1374 = vmatpush1.msra.mxu0 0.0
        %1375 = vmatprep.subr.mxu0 0.0
        %1376 = vmatpush1.msra.mxu0 0.0
        %1377 = vmatprep.subr.mxu0 0.0
        %1378 = vmatpush1.msra.mxu0 0.0
        %1379 = vmatprep.subr.mxu0 0.0
        %1380 = vmatpush1.msra.mxu0 0.0
        %1381 = vmatprep.subr.mxu0 0.0
        %1382 = vmatpush1.msra.mxu0 0.0
        %1383 = vmatprep.subr.mxu0 0.0
        %1384 = vmatpush1.msra.mxu0 0.0
        %1385 = vmatprep.subr.mxu0 0.0
        %1386 = vmatpush1.msra.mxu0 0.0
        %1387 = vmatprep.subr.mxu0 0.0
        %1388 = vmatpush1.msra.mxu0 0.0
        %1389 = vmatprep.subr.mxu0 0.0
        %1390 = vmatpush1.msra.mxu0 0.0
        %1391 = vmatprep.subr.mxu0 0.0
        %1392 = vmatpush1.msra.mxu0 0.0
        %1393 = vmatprep.subr.mxu0 0.0
        %1394 = vmatpush1.msra.mxu0 0.0
        %1395 = vmatprep.subr.mxu0 0.0
        %1396 = vmatpush1.msra.mxu0 0.0
        %1397 = vmatprep.subr.mxu0 0.0
        %1398 = vmatpush1.msra.mxu0 0.0
        %1399 = vmatprep.subr.mxu0 0.0
        %1400 = vmatpush1.msra.mxu0 0.0
        %1401 = vmatprep.subr.mxu0 0.0
        %1402 = vmatpush1.msra.mxu0 0.0
        %1403 = vmatprep.subr.mxu0 0.0
        %1404 = vmatpush1.msra.mxu0 0.0
        %1405 = vmatprep.subr.mxu0 0.0
        %1406 = vmatpush1.msra.mxu0 0.0
        %1407 = vmatprep.subr.mxu0 0.0
        %1408 = vmatpush1.msra.mxu0 0.0
        %1409 = vmatprep.subr.mxu0 0.0
        %1410 = vmatpush1.msra.mxu0 0.0
        %1411 = vmatprep.subr.mxu0 0.0
        %1412 = vmatpush1.msra.mxu0 0.0
        %1413 = vmatprep.subr.mxu0 0.0
        %1414 = vmatpush1.msra.mxu0 0.0
        %1415 = vmatprep.subr.mxu0 0.0
        %1416 = vmatpush1.msra.mxu0 0.0
        %1417 = vmatprep.subr.mxu0 0.0
        %1418 = vmatpush1.msra.mxu0 0.0
        %1419 = vmatprep.subr.mxu0 0.0
        %1420 = vmatpush1.msra.mxu0 0.0
        %1421 = vmatprep.subr.mxu0 0.0
        %1422 = vmatpush1.msra.mxu0 0.0
        %1423 = vmatprep.subr.mxu0 0.0
        %1424 = vmatpush1.msra.mxu0 0.0
        %1425 = vmatprep.mubr.f32.mxu0 0.0
        %1426 = vmatmul.mubr.f32.gmra.mrb[0].mxu0 %v1338
        %v1427 = vpop.f32.mrb[0].mxu0
        %v1428 = vadd.f32 0.0, %v1427
        %v1429 = vpop.f32.mrb[0].mxu0
        %1430 = vmatprep.mubr.f32.mxu0 0.0
        %1431 = vmatmul.mubr.f32.gmra.mrb[0].mxu0 %v1341
        %v1432 = vpop.f32.mrb[0].mxu0
        %v1433 = vadd.f32 0.0, %v1432
        %v1434 = vpop.f32.mrb[0].mxu0
        %1435 = vmatprep.mubr.f32.mxu0 0.0
        %1436 = vmatmul.mubr.f32.gmra.mrb[0].mxu0 %v1344
        %v1437 = vpop.f32.mrb[0].mxu0
        %v1438 = vadd.f32 0.0, %v1437
        %v1439 = vpop.f32.mrb[0].mxu0
        %1440 = vmatprep.mubr.f32.mxu0 0.0
        %1441 = vmatmul.mubr.f32.gmra.mrb[0].mxu0 %v1347
        %v1442 = vpop.f32.mrb[0].mxu0
        %v1443 = vadd.f32 0.0, %v1442
        %v1444 = vpop.f32.mrb[0].mxu0
        %1445 = vmatprep.mubr.f32.mxu0 0.0
        %1446 = vmatmul.mubr.f32.gmra.mrb[0].mxu0 %v1350
        %v1447 = vpop.f32.mrb[0].mxu0
        %v1448 = vadd.f32 0.0, %v1447
        %v1449 = vpop.f32.mrb[0].mxu0
        %1450 = vmatprep.mubr.f32.mxu0 0.0
        %1451 = vmatmul.mubr.f32.gmra.mrb[0].mxu0 %v1353
        %v1452 = vpop.f32.mrb[0].mxu0
        %v1453 = vadd.f32 0.0, %v1452
        %v1454 = vpop.f32.mrb[0].mxu0
        %1455 = vmatprep.mubr.f32.mxu0 0.0
        %1456 = vmatmul.mubr.f32.gmra.mrb[0].mxu0 %v1356
        %v1457 = vpop.f32.mrb[0].mxu0
        %v1458 = vadd.f32 0.0, %v1457
        %v1459 = vpop.f32.mrb[0].mxu0
        %1460 = vmatprep.mubr.f32.mxu0 0.0
        %1461 = vmatmul.mubr.f32.gmra.mrb[0].mxu0 %v1359
        %v1462 = vpop.f32.mrb[0].mxu0
        %v1463 = vadd.f32 0.0, %v1462
        %v1464 = vpop.f32.mrb[0].mxu0
        %1465 = vdwg.mxu0
        %v1466 = vadd.f32 %v1316, %v1428
        %v1467 = vadd.f32 %v1317, %v1433
        %v1468 = vadd.f32 %v1318, %v1438
        %v1469 = vadd.f32 %v1319, %v1443
        %v1470 = vadd.f32 %v1320, %v1448
        %v1471 = vadd.f32 %v1321, %v1453
        %v1472 = vadd.f32 %v1322, %v1458
        %v1473 = vadd.f32 %v1323, %v1463
        %v1474 = vld [vmem:[#allocation2 + $0x2] sm:$0xff]
        %v1475 = vld [vmem:[#allocation2 + $0x12] sm:$0xff]
        %v1476 = vld [vmem:[#allocation2 + $0x22] sm:$0xff]
        %v1477 = vld [vmem:[#allocation2 + $0x32] sm:$0xff]
        %v1478 = vld [vmem:[#allocation2 + $0x42] sm:$0xff]
        %v1479 = vld [vmem:[#allocation2 + $0x52] sm:$0xff]
        %v1480 = vld [vmem:[#allocation2 + $0x62] sm:$0xff]
        %v1481 = vld [vmem:[#allocation2 + $0x72] sm:$0xff]
        %s1482 = scalar_lea.vmem [#allocation3], 160
        %v1483 = vld [vmem:[%s1482] sm:$0xff]
        %v1484 = vld [vmem:[%s1482 + $0x8] sm:$0xff]
        %v1485 = vld [vmem:[%s1482 + $0x10] sm:$0xff]
        %v1486 = vld [vmem:[%s1482 + $0x18] sm:$0xff]
        %v1488 = vsel %vm327, %v1474, 0
        %v1491 = vsel %vm327, %v1475, 0
        %v1494 = vsel %vm327, %v1476, 0
        %v1497 = vsel %vm327, %v1477, 0
        %v1500 = vsel %vm327, %v1478, 0
        %v1503 = vsel %vm327, %v1479, 0
        %v1506 = vsel %vm327, %v1480, 0
        %v1509 = vsel %vm327, %v1481, 0
        %1511 = vmatprep.subr.mxu0 0.0
        %1512 = vmatpush1.msra.mxu0 %v1483
        %1513 = vmatprep.subr.mxu0 0.0
        %1514 = vmatpush1.msra.mxu0 %v1484
        %1515 = vmatprep.subr.mxu0 0.0
        %1516 = vmatpush1.msra.mxu0 %v1485
        %1517 = vmatprep.subr.mxu0 0.0
        %1518 = vmatpush1.msra.mxu0 %v1486
        %1519 = vmatprep.subr.mxu0 0.0
        %1520 = vmatpush1.msra.mxu0 0.0
        %1521 = vmatprep.subr.mxu0 0.0
        %1522 = vmatpush1.msra.mxu0 0.0
        %1523 = vmatprep.subr.mxu0 0.0
        %1524 = vmatpush1.msra.mxu0 0.0
        %1525 = vmatprep.subr.mxu0 0.0
        %1526 = vmatpush1.msra.mxu0 0.0
        %1527 = vmatprep.subr.mxu0 0.0
        %1528 = vmatpush1.msra.mxu0 0.0
        %1529 = vmatprep.subr.mxu0 0.0
        %1530 = vmatpush1.msra.mxu0 0.0
        %1531 = vmatprep.subr.mxu0 0.0
        %1532 = vmatpush1.msra.mxu0 0.0
        %1533 = vmatprep.subr.mxu0 0.0
        %1534 = vmatpush1.msra.mxu0 0.0
        %1535 = vmatprep.subr.mxu0 0.0
        %1536 = vmatpush1.msra.mxu0 0.0
        %1537 = vmatprep.subr.mxu0 0.0
        %1538 = vmatpush1.msra.mxu0 0.0
        %1539 = vmatprep.subr.mxu0 0.0
        %1540 = vmatpush1.msra.mxu0 0.0
        %1541 = vmatprep.subr.mxu0 0.0
        %1542 = vmatpush1.msra.mxu0 0.0
        %1543 = vmatprep.subr.mxu0 0.0
        %1544 = vmatpush1.msra.mxu0 0.0
        %1545 = vmatprep.subr.mxu0 0.0
        %1546 = vmatpush1.msra.mxu0 0.0
        %1547 = vmatprep.subr.mxu0 0.0
        %1548 = vmatpush1.msra.mxu0 0.0
        %1549 = vmatprep.subr.mxu0 0.0
        %1550 = vmatpush1.msra.mxu0 0.0
        %1551 = vmatprep.subr.mxu0 0.0
        %1552 = vmatpush1.msra.mxu0 0.0
        %1553 = vmatprep.subr.mxu0 0.0
        %1554 = vmatpush1.msra.mxu0 0.0
        %1555 = vmatprep.subr.mxu0 0.0
        %1556 = vmatpush1.msra.mxu0 0.0
        %1557 = vmatprep.subr.mxu0 0.0
        %1558 = vmatpush1.msra.mxu0 0.0
        %1559 = vmatprep.subr.mxu0 0.0
        %1560 = vmatpush1.msra.mxu0 0.0
        %1561 = vmatprep.subr.mxu0 0.0
        %1562 = vmatpush1.msra.mxu0 0.0
        %1563 = vmatprep.subr.mxu0 0.0
        %1564 = vmatpush1.msra.mxu0 0.0
        %1565 = vmatprep.subr.mxu0 0.0
        %1566 = vmatpush1.msra.mxu0 0.0
        %1567 = vmatprep.subr.mxu0 0.0
        %1568 = vmatpush1.msra.mxu0 0.0
        %1569 = vmatprep.subr.mxu0 0.0
        %1570 = vmatpush1.msra.mxu0 0.0
        %1571 = vmatprep.subr.mxu0 0.0
        %1572 = vmatpush1.msra.mxu0 0.0
        %1573 = vmatprep.subr.mxu0 0.0
        %1574 = vmatpush1.msra.mxu0 0.0
        %1575 = vmatprep.mubr.f32.mxu0 0.0
        %1576 = vmatmul.mubr.f32.gmra.mrb[0].mxu0 %v1488
        %v1577 = vpop.f32.mrb[0].mxu0
        %v1578 = vadd.f32 0.0, %v1577
        %v1579 = vpop.f32.mrb[0].mxu0
        %1580 = vmatprep.mubr.f32.mxu0 0.0
        %1581 = vmatmul.mubr.f32.gmra.mrb[0].mxu0 %v1491
        %v1582 = vpop.f32.mrb[0].mxu0
        %v1583 = vadd.f32 0.0, %v1582
        %v1584 = vpop.f32.mrb[0].mxu0
        %1585 = vmatprep.mubr.f32.mxu0 0.0
        %1586 = vmatmul.mubr.f32.gmra.mrb[0].mxu0 %v1494
        %v1587 = vpop.f32.mrb[0].mxu0
        %v1588 = vadd.f32 0.0, %v1587
        %v1589 = vpop.f32.mrb[0].mxu0
        %1590 = vmatprep.mubr.f32.mxu0 0.0
        %1591 = vmatmul.mubr.f32.gmra.mrb[0].mxu0 %v1497
        %v1592 = vpop.f32.mrb[0].mxu0
        %v1593 = vadd.f32 0.0, %v1592
        %v1594 = vpop.f32.mrb[0].mxu0
        %1595 = vmatprep.mubr.f32.mxu0 0.0
        %1596 = vmatmul.mubr.f32.gmra.mrb[0].mxu0 %v1500
        %v1597 = vpop.f32.mrb[0].mxu0
        %v1598 = vadd.f32 0.0, %v1597
        %v1599 = vpop.f32.mrb[0].mxu0
        %1600 = vmatprep.mubr.f32.mxu0 0.0
        %1601 = vmatmul.mubr.f32.gmra.mrb[0].mxu0 %v1503
        %v1602 = vpop.f32.mrb[0].mxu0
        %v1603 = vadd.f32 0.0, %v1602
        %v1604 = vpop.f32.mrb[0].mxu0
        %1605 = vmatprep.mubr.f32.mxu0 0.0
        %1606 = vmatmul.mubr.f32.gmra.mrb[0].mxu0 %v1506
        %v1607 = vpop.f32.mrb[0].mxu0
        %v1608 = vadd.f32 0.0, %v1607
        %v1609 = vpop.f32.mrb[0].mxu0
        %1610 = vmatprep.mubr.f32.mxu0 0.0
        %1611 = vmatmul.mubr.f32.gmra.mrb[0].mxu0 %v1509
        %v1612 = vpop.f32.mrb[0].mxu0
        %v1613 = vadd.f32 0.0, %v1612
        %v1614 = vpop.f32.mrb[0].mxu0
        %1615 = vdwg.mxu0
        %v1616 = vadd.f32 %v1466, %v1578
        %v1617 = vadd.f32 %v1467, %v1583
        %v1618 = vadd.f32 %v1468, %v1588
        %v1619 = vadd.f32 %v1469, %v1593
        %v1620 = vadd.f32 %v1470, %v1598
        %v1621 = vadd.f32 %v1471, %v1603
        %v1622 = vadd.f32 %v1472, %v1608
        %v1623 = vadd.f32 %v1473, %v1613
        %v1624 = vmax.f32 %v1616, 0.0
        %v1625 = vmax.f32 %v1617, 0.0
        %v1626 = vmax.f32 %v1618, 0.0
        %v1627 = vmax.f32 %v1619, 0.0
        %v1628 = vmax.f32 %v1620, 0.0
        %v1629 = vmax.f32 %v1621, 0.0
        %v1630 = vmax.f32 %v1622, 0.0
        %v1631 = vmax.f32 %v1623, 0.0
        %1632 = vst.msk [vmem:[#allocation2 + $0x1] sm:$0xff] %vm327, %v1624
        %1633 = vst.msk [vmem:[#allocation2 + $0x11] sm:$0xff] %vm327, %v1625
        %1634 = vst.msk [vmem:[#allocation2 + $0x21] sm:$0xff] %vm327, %v1626
        %1635 = vst.msk [vmem:[#allocation2 + $0x31] sm:$0xff] %vm327, %v1627
        %1636 = vst.msk [vmem:[#allocation2 + $0x41] sm:$0xff] %vm327, %v1628
        %1637 = vst.msk [vmem:[#allocation2 + $0x51] sm:$0xff] %vm327, %v1629
        %1638 = vst.msk [vmem:[#allocation2 + $0x61] sm:$0xff] %vm327, %v1630
        %1639 = vst.msk [vmem:[#allocation2 + $0x71] sm:$0xff] %vm327, %v1631
        %s1640 = scalar_lea.vmem %s4, 2
        %v1641 = vld [vmem:[%s1640] sm:$0x1]
        %v1642 = vld [vmem:[#allocation2] sm:$0xff]
        %v1643 = vld [vmem:[#allocation2 + $0x10] sm:$0xff]
        %v1644 = vld [vmem:[#allocation2 + $0x20] sm:$0xff]
        %v1645 = vld [vmem:[#allocation2 + $0x30] sm:$0xff]
        %v1646 = vld [vmem:[#allocation2 + $0x40] sm:$0xff]
        %v1647 = vld [vmem:[#allocation2 + $0x50] sm:$0xff]
        %v1648 = vld [vmem:[#allocation2 + $0x60] sm:$0xff]
        %v1649 = vld [vmem:[#allocation2 + $0x70] sm:$0xff]
        %s1650 = scalar_lea.vmem [#allocation3], 192
        %v1651 = vld [vmem:[%s1650] sm:$0xff]
        %v1652 = vld [vmem:[%s1650 + $0x8] sm:$0xff]
        %v1653 = vld [vmem:[%s1650 + $0x10] sm:$0xff]
        %v1654 = vld [vmem:[%s1650 + $0x18] sm:$0xff]
        %v1656 = vsel %vm327, %v1642, 0
        %v1659 = vsel %vm327, %v1643, 0
        %v1662 = vsel %vm327, %v1644, 0
        %v1665 = vsel %vm327, %v1645, 0
        %v1668 = vsel %vm327, %v1646, 0
        %v1671 = vsel %vm327, %v1647, 0
        %v1674 = vsel %vm327, %v1648, 0
        %v1677 = vsel %vm327, %v1649, 0
        %1679 = vmatprep.subr.mxu0 0.0
        %1680 = vmatpush1.msra.mxu0 %v1651
        %1681 = vmatprep.subr.mxu0 0.0
        %1682 = vmatpush1.msra.mxu0 %v1652
        %1683 = vmatprep.subr.mxu0 0.0
        %1684 = vmatpush1.msra.mxu0 %v1653
        %1685 = vmatprep.subr.mxu0 0.0
        %1686 = vmatpush1.msra.mxu0 %v1654
        %1687 = vmatprep.subr.mxu0 0.0
        %1688 = vmatpush1.msra.mxu0 0.0
        %1689 = vmatprep.subr.mxu0 0.0
        %1690 = vmatpush1.msra.mxu0 0.0
        %1691 = vmatprep.subr.mxu0 0.0
        %1692 = vmatpush1.msra.mxu0 0.0
        %1693 = vmatprep.subr.mxu0 0.0
        %1694 = vmatpush1.msra.mxu0 0.0
        %1695 = vmatprep.subr.mxu0 0.0
        %1696 = vmatpush1.msra.mxu0 0.0
        %1697 = vmatprep.subr.mxu0 0.0
        %1698 = vmatpush1.msra.mxu0 0.0
        %1699 = vmatprep.subr.mxu0 0.0
        %1700 = vmatpush1.msra.mxu0 0.0
        %1701 = vmatprep.subr.mxu0 0.0
        %1702 = vmatpush1.msra.mxu0 0.0
        %1703 = vmatprep.subr.mxu0 0.0
        %1704 = vmatpush1.msra.mxu0 0.0
        %1705 = vmatprep.subr.mxu0 0.0
        %1706 = vmatpush1.msra.mxu0 0.0
        %1707 = vmatprep.subr.mxu0 0.0
        %1708 = vmatpush1.msra.mxu0 0.0
        %1709 = vmatprep.subr.mxu0 0.0
        %1710 = vmatpush1.msra.mxu0 0.0
        %1711 = vmatprep.subr.mxu0 0.0
        %1712 = vmatpush1.msra.mxu0 0.0
        %1713 = vmatprep.subr.mxu0 0.0
        %1714 = vmatpush1.msra.mxu0 0.0
        %1715 = vmatprep.subr.mxu0 0.0
        %1716 = vmatpush1.msra.mxu0 0.0
        %1717 = vmatprep.subr.mxu0 0.0
        %1718 = vmatpush1.msra.mxu0 0.0
        %1719 = vmatprep.subr.mxu0 0.0
        %1720 = vmatpush1.msra.mxu0 0.0
        %1721 = vmatprep.subr.mxu0 0.0
        %1722 = vmatpush1.msra.mxu0 0.0
        %1723 = vmatprep.subr.mxu0 0.0
        %1724 = vmatpush1.msra.mxu0 0.0
        %1725 = vmatprep.subr.mxu0 0.0
        %1726 = vmatpush1.msra.mxu0 0.0
        %1727 = vmatprep.subr.mxu0 0.0
        %1728 = vmatpush1.msra.mxu0 0.0
        %1729 = vmatprep.subr.mxu0 0.0
        %1730 = vmatpush1.msra.mxu0 0.0
        %1731 = vmatprep.subr.mxu0 0.0
        %1732 = vmatpush1.msra.mxu0 0.0
        %1733 = vmatprep.subr.mxu0 0.0
        %1734 = vmatpush1.msra.mxu0 0.0
        %1735 = vmatprep.subr.mxu0 0.0
        %1736 = vmatpush1.msra.mxu0 0.0
        %1737 = vmatprep.subr.mxu0 0.0
        %1738 = vmatpush1.msra.mxu0 0.0
        %1739 = vmatprep.subr.mxu0 0.0
        %1740 = vmatpush1.msra.mxu0 0.0
        %1741 = vmatprep.subr.mxu0 0.0
        %1742 = vmatpush1.msra.mxu0 0.0
        %1743 = vmatprep.mubr.f32.mxu0 0.0
        %1744 = vmatmul.mubr.f32.gmra.mrb[0].mxu0 %v1656
        %v1745 = vpop.f32.mrb[0].mxu0
        %v1746 = vadd.f32 0.0, %v1745
        %v1747 = vpop.f32.mrb[0].mxu0
        %1748 = vmatprep.mubr.f32.mxu0 0.0
        %1749 = vmatmul.mubr.f32.gmra.mrb[0].mxu0 %v1659
        %v1750 = vpop.f32.mrb[0].mxu0
        %v1751 = vadd.f32 0.0, %v1750
        %v1752 = vpop.f32.mrb[0].mxu0
        %1753 = vmatprep.mubr.f32.mxu0 0.0
        %1754 = vmatmul.mubr.f32.gmra.mrb[0].mxu0 %v1662
        %v1755 = vpop.f32.mrb[0].mxu0
        %v1756 = vadd.f32 0.0, %v1755
        %v1757 = vpop.f32.mrb[0].mxu0
        %1758 = vmatprep.mubr.f32.mxu0 0.0
        %1759 = vmatmul.mubr.f32.gmra.mrb[0].mxu0 %v1665
        %v1760 = vpop.f32.mrb[0].mxu0
        %v1761 = vadd.f32 0.0, %v1760
        %v1762 = vpop.f32.mrb[0].mxu0
        %1763 = vmatprep.mubr.f32.mxu0 0.0
        %1764 = vmatmul.mubr.f32.gmra.mrb[0].mxu0 %v1668
        %v1765 = vpop.f32.mrb[0].mxu0
        %v1766 = vadd.f32 0.0, %v1765
        %v1767 = vpop.f32.mrb[0].mxu0
        %1768 = vmatprep.mubr.f32.mxu0 0.0
        %1769 = vmatmul.mubr.f32.gmra.mrb[0].mxu0 %v1671
        %v1770 = vpop.f32.mrb[0].mxu0
        %v1771 = vadd.f32 0.0, %v1770
        %v1772 = vpop.f32.mrb[0].mxu0
        %1773 = vmatprep.mubr.f32.mxu0 0.0
        %1774 = vmatmul.mubr.f32.gmra.mrb[0].mxu0 %v1674
        %v1775 = vpop.f32.mrb[0].mxu0
        %v1776 = vadd.f32 0.0, %v1775
        %v1777 = vpop.f32.mrb[0].mxu0
        %1778 = vmatprep.mubr.f32.mxu0 0.0
        %1779 = vmatmul.mubr.f32.gmra.mrb[0].mxu0 %v1677
        %v1780 = vpop.f32.mrb[0].mxu0
        %v1781 = vadd.f32 0.0, %v1780
        %v1782 = vpop.f32.mrb[0].mxu0
        %1783 = vdwg.mxu0
        %v1785 = vlaneseq
        %v1786 = vshrl.u32 %v1785, 7
        %v1787 = vsub.s32 0, %v1786
        %v1788 = vrot.slane %v1641, %v1787
        %v1790 = vadd.f32 %v1788, %v1746
        %v1791 = vadd.f32 %v1788, %v1751
        %v1792 = vadd.f32 %v1788, %v1756
        %v1793 = vadd.f32 %v1788, %v1761
        %v1794 = vadd.f32 %v1788, %v1766
        %v1795 = vadd.f32 %v1788, %v1771
        %v1796 = vadd.f32 %v1788, %v1776
        %v1797 = vadd.f32 %v1788, %v1781
        %v1798 = vld [vmem:[#allocation2 + $0x1] sm:$0xff]
        %v1799 = vld [vmem:[#allocation2 + $0x11] sm:$0xff]
        %v1800 = vld [vmem:[#allocation2 + $0x21] sm:$0xff]
        %v1801 = vld [vmem:[#allocation2 + $0x31] sm:$0xff]
        %v1802 = vld [vmem:[#allocation2 + $0x41] sm:$0xff]
        %v1803 = vld [vmem:[#allocation2 + $0x51] sm:$0xff]
        %v1804 = vld [vmem:[#allocation2 + $0x61] sm:$0xff]
        %v1805 = vld [vmem:[#allocation2 + $0x71] sm:$0xff]
        %s1806 = scalar_lea.vmem [#allocation3], 224
        %v1807 = vld [vmem:[%s1806] sm:$0xff]
        %v1808 = vld [vmem:[%s1806 + $0x8] sm:$0xff]
        %v1809 = vld [vmem:[%s1806 + $0x10] sm:$0xff]
        %v1810 = vld [vmem:[%s1806 + $0x18] sm:$0xff]
        %v1812 = vsel %vm327, %v1798, 0
        %v1815 = vsel %vm327, %v1799, 0
        %v1818 = vsel %vm327, %v1800, 0
        %v1821 = vsel %vm327, %v1801, 0
        %v1824 = vsel %vm327, %v1802, 0
        %v1827 = vsel %vm327, %v1803, 0
        %v1830 = vsel %vm327, %v1804, 0
        %v1833 = vsel %vm327, %v1805, 0
        %1835 = vmatprep.subr.mxu0 0.0
        %1836 = vmatpush1.msra.mxu0 %v1807
        %1837 = vmatprep.subr.mxu0 0.0
        %1838 = vmatpush1.msra.mxu0 %v1808
        %1839 = vmatprep.subr.mxu0 0.0
        %1840 = vmatpush1.msra.mxu0 %v1809
        %1841 = vmatprep.subr.mxu0 0.0
        %1842 = vmatpush1.msra.mxu0 %v1810
        %1843 = vmatprep.subr.mxu0 0.0
        %1844 = vmatpush1.msra.mxu0 0.0
        %1845 = vmatprep.subr.mxu0 0.0
        %1846 = vmatpush1.msra.mxu0 0.0
        %1847 = vmatprep.subr.mxu0 0.0
        %1848 = vmatpush1.msra.mxu0 0.0
        %1849 = vmatprep.subr.mxu0 0.0
        %1850 = vmatpush1.msra.mxu0 0.0
        %1851 = vmatprep.subr.mxu0 0.0
        %1852 = vmatpush1.msra.mxu0 0.0
        %1853 = vmatprep.subr.mxu0 0.0
        %1854 = vmatpush1.msra.mxu0 0.0
        %1855 = vmatprep.subr.mxu0 0.0
        %1856 = vmatpush1.msra.mxu0 0.0
        %1857 = vmatprep.subr.mxu0 0.0
        %1858 = vmatpush1.msra.mxu0 0.0
        %1859 = vmatprep.subr.mxu0 0.0
        %1860 = vmatpush1.msra.mxu0 0.0
        %1861 = vmatprep.subr.mxu0 0.0
        %1862 = vmatpush1.msra.mxu0 0.0
        %1863 = vmatprep.subr.mxu0 0.0
        %1864 = vmatpush1.msra.mxu0 0.0
        %1865 = vmatprep.subr.mxu0 0.0
        %1866 = vmatpush1.msra.mxu0 0.0
        %1867 = vmatprep.subr.mxu0 0.0
        %1868 = vmatpush1.msra.mxu0 0.0
        %1869 = vmatprep.subr.mxu0 0.0
        %1870 = vmatpush1.msra.mxu0 0.0
        %1871 = vmatprep.subr.mxu0 0.0
        %1872 = vmatpush1.msra.mxu0 0.0
        %1873 = vmatprep.subr.mxu0 0.0
        %1874 = vmatpush1.msra.mxu0 0.0
        %1875 = vmatprep.subr.mxu0 0.0
        %1876 = vmatpush1.msra.mxu0 0.0
        %1877 = vmatprep.subr.mxu0 0.0
        %1878 = vmatpush1.msra.mxu0 0.0
        %1879 = vmatprep.subr.mxu0 0.0
        %1880 = vmatpush1.msra.mxu0 0.0
        %1881 = vmatprep.subr.mxu0 0.0
        %1882 = vmatpush1.msra.mxu0 0.0
        %1883 = vmatprep.subr.mxu0 0.0
        %1884 = vmatpush1.msra.mxu0 0.0
        %1885 = vmatprep.subr.mxu0 0.0
        %1886 = vmatpush1.msra.mxu0 0.0
        %1887 = vmatprep.subr.mxu0 0.0
        %1888 = vmatpush1.msra.mxu0 0.0
        %1889 = vmatprep.subr.mxu0 0.0
        %1890 = vmatpush1.msra.mxu0 0.0
        %1891 = vmatprep.subr.mxu0 0.0
        %1892 = vmatpush1.msra.mxu0 0.0
        %1893 = vmatprep.subr.mxu0 0.0
        %1894 = vmatpush1.msra.mxu0 0.0
        %1895 = vmatprep.subr.mxu0 0.0
        %1896 = vmatpush1.msra.mxu0 0.0
        %1897 = vmatprep.subr.mxu0 0.0
        %1898 = vmatpush1.msra.mxu0 0.0
        %1899 = vmatprep.mubr.f32.mxu0 0.0
        %1900 = vmatmul.mubr.f32.gmra.mrb[0].mxu0 %v1812
        %v1901 = vpop.f32.mrb[0].mxu0
        %v1902 = vadd.f32 0.0, %v1901
        %v1903 = vpop.f32.mrb[0].mxu0
        %1904 = vmatprep.mubr.f32.mxu0 0.0
        %1905 = vmatmul.mubr.f32.gmra.mrb[0].mxu0 %v1815
        %v1906 = vpop.f32.mrb[0].mxu0
        %v1907 = vadd.f32 0.0, %v1906
        %v1908 = vpop.f32.mrb[0].mxu0
        %1909 = vmatprep.mubr.f32.mxu0 0.0
        %1910 = vmatmul.mubr.f32.gmra.mrb[0].mxu0 %v1818
        %v1911 = vpop.f32.mrb[0].mxu0
        %v1912 = vadd.f32 0.0, %v1911
        %v1913 = vpop.f32.mrb[0].mxu0
        %1914 = vmatprep.mubr.f32.mxu0 0.0
        %1915 = vmatmul.mubr.f32.gmra.mrb[0].mxu0 %v1821
        %v1916 = vpop.f32.mrb[0].mxu0
        %v1917 = vadd.f32 0.0, %v1916
        %v1918 = vpop.f32.mrb[0].mxu0
        %1919 = vmatprep.mubr.f32.mxu0 0.0
        %1920 = vmatmul.mubr.f32.gmra.mrb[0].mxu0 %v1824
        %v1921 = vpop.f32.mrb[0].mxu0
        %v1922 = vadd.f32 0.0, %v1921
        %v1923 = vpop.f32.mrb[0].mxu0
        %1924 = vmatprep.mubr.f32.mxu0 0.0
        %1925 = vmatmul.mubr.f32.gmra.mrb[0].mxu0 %v1827
        %v1926 = vpop.f32.mrb[0].mxu0
        %v1927 = vadd.f32 0.0, %v1926
        %v1928 = vpop.f32.mrb[0].mxu0
        %1929 = vmatprep.mubr.f32.mxu0 0.0
        %1930 = vmatmul.mubr.f32.gmra.mrb[0].mxu0 %v1830
        %v1931 = vpop.f32.mrb[0].mxu0
        %v1932 = vadd.f32 0.0, %v1931
        %v1933 = vpop.f32.mrb[0].mxu0
        %1934 = vmatprep.mubr.f32.mxu0 0.0
        %1935 = vmatmul.mubr.f32.gmra.mrb[0].mxu0 %v1833
        %v1936 = vpop.f32.mrb[0].mxu0
        %v1937 = vadd.f32 0.0, %v1936
        %v1938 = vpop.f32.mrb[0].mxu0
        %1939 = vdwg.mxu0
        %v1940 = vadd.f32 %v1790, %v1902
        %v1941 = vadd.f32 %v1791, %v1907
        %v1942 = vadd.f32 %v1792, %v1912
        %v1943 = vadd.f32 %v1793, %v1917
        %v1944 = vadd.f32 %v1794, %v1922
        %v1945 = vadd.f32 %v1795, %v1927
        %v1946 = vadd.f32 %v1796, %v1932
        %v1947 = vadd.f32 %v1797, %v1937
        %v1948 = vld [vmem:[#allocation2 + $0x2] sm:$0xff]
        %v1949 = vld [vmem:[#allocation2 + $0x12] sm:$0xff]
        %v1950 = vld [vmem:[#allocation2 + $0x22] sm:$0xff]
        %v1951 = vld [vmem:[#allocation2 + $0x32] sm:$0xff]
        %v1952 = vld [vmem:[#allocation2 + $0x42] sm:$0xff]
        %v1953 = vld [vmem:[#allocation2 + $0x52] sm:$0xff]
        %v1954 = vld [vmem:[#allocation2 + $0x62] sm:$0xff]
        %v1955 = vld [vmem:[#allocation2 + $0x72] sm:$0xff]
        %s1956 = scalar_lea.vmem [#allocation3], 256
        %v1957 = vld [vmem:[%s1956] sm:$0xff]
        %v1958 = vld [vmem:[%s1956 + $0x8] sm:$0xff]
        %v1959 = vld [vmem:[%s1956 + $0x10] sm:$0xff]
        %v1960 = vld [vmem:[%s1956 + $0x18] sm:$0xff]
        %v1962 = vsel %vm327, %v1948, 0
        %v1965 = vsel %vm327, %v1949, 0
        %v1968 = vsel %vm327, %v1950, 0
        %v1971 = vsel %vm327, %v1951, 0
        %v1974 = vsel %vm327, %v1952, 0
        %v1977 = vsel %vm327, %v1953, 0
        %v1980 = vsel %vm327, %v1954, 0
        %v1983 = vsel %vm327, %v1955, 0
        %1985 = vmatprep.subr.mxu0 0.0
        %1986 = vmatpush1.msra.mxu0 %v1957
        %1987 = vmatprep.subr.mxu0 0.0
        %1988 = vmatpush1.msra.mxu0 %v1958
        %1989 = vmatprep.subr.mxu0 0.0
        %1990 = vmatpush1.msra.mxu0 %v1959
        %1991 = vmatprep.subr.mxu0 0.0
        %1992 = vmatpush1.msra.mxu0 %v1960
        %1993 = vmatprep.subr.mxu0 0.0
        %1994 = vmatpush1.msra.mxu0 0.0
        %1995 = vmatprep.subr.mxu0 0.0
        %1996 = vmatpush1.msra.mxu0 0.0
        %1997 = vmatprep.subr.mxu0 0.0
        %1998 = vmatpush1.msra.mxu0 0.0
        %1999 = vmatprep.subr.mxu0 0.0
        %2000 = vmatpush1.msra.mxu0 0.0
        %2001 = vmatprep.subr.mxu0 0.0
        %2002 = vmatpush1.msra.mxu0 0.0
        %2003 = vmatprep.subr.mxu0 0.0
        %2004 = vmatpush1.msra.mxu0 0.0
        %2005 = vmatprep.subr.mxu0 0.0
        %2006 = vmatpush1.msra.mxu0 0.0
        %2007 = vmatprep.subr.mxu0 0.0
        %2008 = vmatpush1.msra.mxu0 0.0
        %2009 = vmatprep.subr.mxu0 0.0
        %2010 = vmatpush1.msra.mxu0 0.0
        %2011 = vmatprep.subr.mxu0 0.0
        %2012 = vmatpush1.msra.mxu0 0.0
        %2013 = vmatprep.subr.mxu0 0.0
        %2014 = vmatpush1.msra.mxu0 0.0
        %2015 = vmatprep.subr.mxu0 0.0
        %2016 = vmatpush1.msra.mxu0 0.0
        %2017 = vmatprep.subr.mxu0 0.0
        %2018 = vmatpush1.msra.mxu0 0.0
        %2019 = vmatprep.subr.mxu0 0.0
        %2020 = vmatpush1.msra.mxu0 0.0
        %2021 = vmatprep.subr.mxu0 0.0
        %2022 = vmatpush1.msra.mxu0 0.0
        %2023 = vmatprep.subr.mxu0 0.0
        %2024 = vmatpush1.msra.mxu0 0.0
        %2025 = vmatprep.subr.mxu0 0.0
        %2026 = vmatpush1.msra.mxu0 0.0
        %2027 = vmatprep.subr.mxu0 0.0
        %2028 = vmatpush1.msra.mxu0 0.0
        %2029 = vmatprep.subr.mxu0 0.0
        %2030 = vmatpush1.msra.mxu0 0.0
        %2031 = vmatprep.subr.mxu0 0.0
        %2032 = vmatpush1.msra.mxu0 0.0
        %2033 = vmatprep.subr.mxu0 0.0
        %2034 = vmatpush1.msra.mxu0 0.0
        %2035 = vmatprep.subr.mxu0 0.0
        %2036 = vmatpush1.msra.mxu0 0.0
        %2037 = vmatprep.subr.mxu0 0.0
        %2038 = vmatpush1.msra.mxu0 0.0
        %2039 = vmatprep.subr.mxu0 0.0
        %2040 = vmatpush1.msra.mxu0 0.0
        %2041 = vmatprep.subr.mxu0 0.0
        %2042 = vmatpush1.msra.mxu0 0.0
        %2043 = vmatprep.subr.mxu0 0.0
        %2044 = vmatpush1.msra.mxu0 0.0
        %2045 = vmatprep.subr.mxu0 0.0
        %2046 = vmatpush1.msra.mxu0 0.0
        %2047 = vmatprep.subr.mxu0 0.0
        %2048 = vmatpush1.msra.mxu0 0.0
        %2049 = vmatprep.mubr.f32.mxu0 0.0
        %2050 = vmatmul.mubr.f32.gmra.mrb[0].mxu0 %v1962
        %v2051 = vpop.f32.mrb[0].mxu0
        %v2052 = vadd.f32 0.0, %v2051
        %v2053 = vpop.f32.mrb[0].mxu0
        %2054 = vmatprep.mubr.f32.mxu0 0.0
        %2055 = vmatmul.mubr.f32.gmra.mrb[0].mxu0 %v1965
        %v2056 = vpop.f32.mrb[0].mxu0
        %v2057 = vadd.f32 0.0, %v2056
        %v2058 = vpop.f32.mrb[0].mxu0
        %2059 = vmatprep.mubr.f32.mxu0 0.0
        %2060 = vmatmul.mubr.f32.gmra.mrb[0].mxu0 %v1968
        %v2061 = vpop.f32.mrb[0].mxu0
        %v2062 = vadd.f32 0.0, %v2061
        %v2063 = vpop.f32.mrb[0].mxu0
        %2064 = vmatprep.mubr.f32.mxu0 0.0
        %2065 = vmatmul.mubr.f32.gmra.mrb[0].mxu0 %v1971
        %v2066 = vpop.f32.mrb[0].mxu0
        %v2067 = vadd.f32 0.0, %v2066
        %v2068 = vpop.f32.mrb[0].mxu0
        %2069 = vmatprep.mubr.f32.mxu0 0.0
        %2070 = vmatmul.mubr.f32.gmra.mrb[0].mxu0 %v1974
        %v2071 = vpop.f32.mrb[0].mxu0
        %v2072 = vadd.f32 0.0, %v2071
        %v2073 = vpop.f32.mrb[0].mxu0
        %2074 = vmatprep.mubr.f32.mxu0 0.0
        %2075 = vmatmul.mubr.f32.gmra.mrb[0].mxu0 %v1977
        %v2076 = vpop.f32.mrb[0].mxu0
        %v2077 = vadd.f32 0.0, %v2076
        %v2078 = vpop.f32.mrb[0].mxu0
        %2079 = vmatprep.mubr.f32.mxu0 0.0
        %2080 = vmatmul.mubr.f32.gmra.mrb[0].mxu0 %v1980
        %v2081 = vpop.f32.mrb[0].mxu0
        %v2082 = vadd.f32 0.0, %v2081
        %v2083 = vpop.f32.mrb[0].mxu0
        %2084 = vmatprep.mubr.f32.mxu0 0.0
        %2085 = vmatmul.mubr.f32.gmra.mrb[0].mxu0 %v1983
        %v2086 = vpop.f32.mrb[0].mxu0
        %v2087 = vadd.f32 0.0, %v2086
        %v2088 = vpop.f32.mrb[0].mxu0
        %2089 = vdwg.mxu0
        %v2090 = vadd.f32 %v1940, %v2052
        %v2091 = vadd.f32 %v1941, %v2057
        %v2092 = vadd.f32 %v1942, %v2062
        %v2093 = vadd.f32 %v1943, %v2067
        %v2094 = vadd.f32 %v1944, %v2072
        %v2095 = vadd.f32 %v1945, %v2077
        %v2096 = vadd.f32 %v1946, %v2082
        %v2097 = vadd.f32 %v1947, %v2087
        %v2098 = vmax.f32 %v2090, 0.0
        %v2099 = vmax.f32 %v2091, 0.0
        %v2100 = vmax.f32 %v2092, 0.0
        %v2101 = vmax.f32 %v2093, 0.0
        %v2102 = vmax.f32 %v2094, 0.0
        %v2103 = vmax.f32 %v2095, 0.0
        %v2104 = vmax.f32 %v2096, 0.0
        %v2105 = vmax.f32 %v2097, 0.0
        %v2106 = vsel %vm327, %v2098, -inf
        %v2107 = vrot.slane %v2106, 4
        %v2108 = vmax.f32 %v2106, %v2107
        %v2109 = vrot.slane %v2108, 2
        %v2110 = vmax.f32 %v2108, %v2109
        %v2111 = vrot.slane %v2110, 1
        %v2112 = vmax.f32 %v2110, %v2111
        %v2113 = vsel %vm327, %v2099, -inf
        %v2114 = vrot.slane %v2113, 4
        %v2115 = vmax.f32 %v2113, %v2114
        %v2116 = vrot.slane %v2115, 2
        %v2117 = vmax.f32 %v2115, %v2116
        %v2118 = vrot.slane %v2117, 1
        %v2119 = vmax.f32 %v2117, %v2118
        %v2120 = vsel %vm327, %v2100, -inf
        %v2121 = vrot.slane %v2120, 4
        %v2122 = vmax.f32 %v2120, %v2121
        %v2123 = vrot.slane %v2122, 2
        %v2124 = vmax.f32 %v2122, %v2123
        %v2125 = vrot.slane %v2124, 1
        %v2126 = vmax.f32 %v2124, %v2125
        %v2127 = vsel %vm327, %v2101, -inf
        %v2128 = vrot.slane %v2127, 4
        %v2129 = vmax.f32 %v2127, %v2128
        %v2130 = vrot.slane %v2129, 2
        %v2131 = vmax.f32 %v2129, %v2130
        %v2132 = vrot.slane %v2131, 1
        %v2133 = vmax.f32 %v2131, %v2132
        %v2134 = vsel %vm327, %v2102, -inf
        %v2135 = vrot.slane %v2134, 4
        %v2136 = vmax.f32 %v2134, %v2135
        %v2137 = vrot.slane %v2136, 2
        %v2138 = vmax.f32 %v2136, %v2137
        %v2139 = vrot.slane %v2138, 1
        %v2140 = vmax.f32 %v2138, %v2139
        %v2141 = vsel %vm327, %v2103, -inf
        %v2142 = vrot.slane %v2141, 4
        %v2143 = vmax.f32 %v2141, %v2142
        %v2144 = vrot.slane %v2143, 2
        %v2145 = vmax.f32 %v2143, %v2144
        %v2146 = vrot.slane %v2145, 1
        %v2147 = vmax.f32 %v2145, %v2146
        %v2148 = vsel %vm327, %v2104, -inf
        %v2149 = vrot.slane %v2148, 4
        %v2150 = vmax.f32 %v2148, %v2149
        %v2151 = vrot.slane %v2150, 2
        %v2152 = vmax.f32 %v2150, %v2151
        %v2153 = vrot.slane %v2152, 1
        %v2154 = vmax.f32 %v2152, %v2153
        %v2155 = vsel %vm327, %v2105, -inf
        %v2156 = vrot.slane %v2155, 4
        %v2157 = vmax.f32 %v2155, %v2156
        %v2158 = vrot.slane %v2157, 2
        %v2159 = vmax.f32 %v2157, %v2158
        %v2160 = vrot.slane %v2159, 1
        %v2161 = vmax.f32 %v2159, %v2160
        %v2162 = vld [vmem:[%s5] sm:$0xff]
        %v2163 = vld [vmem:[%s5 + $0x8] sm:$0xff]
        %v2164 = vld [vmem:[%s5 + $0x10] sm:$0xff]
        %v2165 = vld [vmem:[%s5 + $0x18] sm:$0xff]
        %v2166 = vld [vmem:[%s6] sm:$0x1]
        %v2168 = vlaneseq
        %v2169 = vshrl.u32 %v2168, 7
        %v2170 = vsub.s32 0, %v2169
        %v2171 = vrot.slane %v2166, %v2170
        %vm2181 = vcmask 1041409
        %v2182 = vsel %vm2181, %v2119, %v2112
        %vm2183 = vcmask 1042434
        %v2184 = vsel %vm2183, %v2126, %v2182
        %vm2185 = vcmask 1043459
        %v2186 = vsel %vm2185, %v2133, %v2184
        %vm2187 = vcmask 1044484
        %v2188 = vsel %vm2187, %v2140, %v2186
        %vm2189 = vcmask 1045509
        %v2190 = vsel %vm2189, %v2147, %v2188
        %vm2191 = vcmask 1046534
        %v2192 = vsel %vm2191, %v2154, %v2190
        %vm2193 = vcmask 1047559
        %v2194 = vsel %vm2193, %v2161, %v2192
        %v2195 = vsel %vm327, %v2194, 0
        %2197 = vmatprep.subr.mxu0 0.0
        %2198 = vmatpush1.msra.mxu0 %v2162
        %2199 = vmatprep.subr.mxu0 0.0
        %2200 = vmatpush1.msra.mxu0 %v2163
        %2201 = vmatprep.subr.mxu0 0.0
        %2202 = vmatpush1.msra.mxu0 %v2164
        %2203 = vmatprep.subr.mxu0 0.0
        %2204 = vmatpush1.msra.mxu0 %v2165
        %2205 = vmatprep.subr.mxu0 0.0
        %2206 = vmatpush1.msra.mxu0 0.0
        %2207 = vmatprep.subr.mxu0 0.0
        %2208 = vmatpush1.msra.mxu0 0.0
        %2209 = vmatprep.subr.mxu0 0.0
        %2210 = vmatpush1.msra.mxu0 0.0
        %2211 = vmatprep.subr.mxu0 0.0
        %2212 = vmatpush1.msra.mxu0 0.0
        %2213 = vmatprep.subr.mxu0 0.0
        %2214 = vmatpush1.msra.mxu0 0.0
        %2215 = vmatprep.subr.mxu0 0.0
        %2216 = vmatpush1.msra.mxu0 0.0
        %2217 = vmatprep.subr.mxu0 0.0
        %2218 = vmatpush1.msra.mxu0 0.0
        %2219 = vmatprep.subr.mxu0 0.0
        %2220 = vmatpush1.msra.mxu0 0.0
        %2221 = vmatprep.subr.mxu0 0.0
        %2222 = vmatpush1.msra.mxu0 0.0
        %2223 = vmatprep.subr.mxu0 0.0
        %2224 = vmatpush1.msra.mxu0 0.0
        %2225 = vmatprep.subr.mxu0 0.0
        %2226 = vmatpush1.msra.mxu0 0.0
        %2227 = vmatprep.subr.mxu0 0.0
        %2228 = vmatpush1.msra.mxu0 0.0
        %2229 = vmatprep.subr.mxu0 0.0
        %2230 = vmatpush1.msra.mxu0 0.0
        %2231 = vmatprep.subr.mxu0 0.0
        %2232 = vmatpush1.msra.mxu0 0.0
        %2233 = vmatprep.subr.mxu0 0.0
        %2234 = vmatpush1.msra.mxu0 0.0
        %2235 = vmatprep.subr.mxu0 0.0
        %2236 = vmatpush1.msra.mxu0 0.0
        %2237 = vmatprep.subr.mxu0 0.0
        %2238 = vmatpush1.msra.mxu0 0.0
        %2239 = vmatprep.subr.mxu0 0.0
        %2240 = vmatpush1.msra.mxu0 0.0
        %2241 = vmatprep.subr.mxu0 0.0
        %2242 = vmatpush1.msra.mxu0 0.0
        %2243 = vmatprep.subr.mxu0 0.0
        %2244 = vmatpush1.msra.mxu0 0.0
        %2245 = vmatprep.subr.mxu0 0.0
        %2246 = vmatpush1.msra.mxu0 0.0
        %2247 = vmatprep.subr.mxu0 0.0
        %2248 = vmatpush1.msra.mxu0 0.0
        %2249 = vmatprep.subr.mxu0 0.0
        %2250 = vmatpush1.msra.mxu0 0.0
        %2251 = vmatprep.subr.mxu0 0.0
        %2252 = vmatpush1.msra.mxu0 0.0
        %2253 = vmatprep.subr.mxu0 0.0
        %2254 = vmatpush1.msra.mxu0 0.0
        %2255 = vmatprep.subr.mxu0 0.0
        %2256 = vmatpush1.msra.mxu0 0.0
        %2257 = vmatprep.subr.mxu0 0.0
        %2258 = vmatpush1.msra.mxu0 0.0
        %2259 = vmatprep.subr.mxu0 0.0
        %2260 = vmatpush1.msra.mxu0 0.0
        %2261 = vmatprep.mubr.f32.mxu0 0.0
        %2262 = vmatmul.mubr.f32.gmra.mrb[0].mxu0 %v2195
        %v2263 = vpop.f32.mrb[0].mxu0
        %v2264 = vadd.f32 %v2171, %v2263
        %v2265 = vpop.f32.mrb[0].mxu0
        %2266 = vdwg.mxu0
        %2267 = vst [vmem:[%s286] sm:$0xff] %v2264
        %s2268 = sand.u32 %s182, 1
        %s2269 = scalar_lea.sflag [#allocation5], %s2268
        %s2270 = sand.u32 %s182, 1
        %s2271 = smul.addr %s2270, 8
        %s2272 = scalar_lea.vmem [#allocation6], %s2271
        // Predicated region
        $region53: #{tpu_custom_call.1} parent=47 // pred_check
          %p2273 = pneg %p192
        $region54: #{tpu_custom_call.1} parent=47 // pred_check_branch
          %2275 = sbr.rel (%p2273) target = $region56
        $region55: #{tpu_custom_call.1} parent=47 // pred_region
          %s2277 = ssub.s32 128, 128
          %2278 = vsyncadd %s2269, %s2277
          %s2279 = smul.addr %s22, 128
          %s2280 = scalar_lea.hbm %s7, %s2279
          %s2282 = sshll.u32 %s2272, 4
          %s2283 = int_to_ptr.vmem [resolvable:$true] %s2282
          %2285 = dma.vmem_to_hbm [thread:$0]  %s2283, 128, %s2280, %s2269
        $region56: #{tpu_custom_call.1} parent=47 // pred_fallthru
          _
      $region48: #{tpu_custom_call.1} parent=5 // pred_fallthru
        _
      %p2286 = scmp.le.s32.totalorder 2, %s17
      // Predicated region
      $region57: #{tpu_custom_call.1} parent=5 // pred_check
        %p2287 = pneg %p2286
      $region58: #{tpu_custom_call.1} parent=5 // pred_check_branch
        %2289 = sbr.rel (%p2287) target = $region60
      $region59: #{tpu_custom_call.1} parent=5 // pred_region
        %s2290 = ssub.s32 %s17, 2
        // Predicated region
        $region61: #{tpu_custom_call.1} parent=59 // pred_check
          %p2291 = pneg %p198
        $region62: #{tpu_custom_call.1} parent=59 // pred_check_branch
          %2293 = sbr.rel (%p2291) target = $region64
        $region63: #{tpu_custom_call.1} parent=59 // pred_region
          %s2294 = sand.u32 %s183, 1
          %s2295 = scalar_lea.sflag [#allocation5], %s2294
          %s2296 = sand.u32 %s183, 1
          %s2297 = smul.addr %s2296, 8
          %s2298 = scalar_lea.vmem [#allocation6], %s2297
          %2299 = dma.done %s2295, 128
        $region64: #{tpu_custom_call.1} parent=59 // pred_fallthru
          _
      $region60: #{tpu_custom_call.1} parent=5 // pred_fallthru
        _
    $region6: #{tpu_custom_call.1} parent=1 // loop_footer
      %s21 = sadd.s32 1, %s17
    $region7: #{tpu_custom_call.1} parent=1 // loop_footer_branch
      %16 = sbr.rel target = $region3
    $region8: #{tpu_custom_call.1} parent=1 // loop_exit
      _
    %2300 = vsyncpa [#allocation4], 1
    %s2301 = scalar_lea.sflag [#allocation4], 1
    %2302 = vsyncpa %s2301, 1
    %2303 = vsyncpa [#allocation5], 1
    %s2304 = scalar_lea.sflag [#allocation5], 1
    %2305 = vsyncpa %s2304, 1

</llo_original>
